<compile_context>
chip_gen: v7x
topology: tpu7x:2x2x1
jax: 0.10.0
libtpu: 0.0.40
codegen_flags: <defaults>
</compile_context>

<pallas_src>
import functools

import jax
import jax.numpy as jnp
from jax.experimental import pallas as pl
from jax.experimental.pallas import tpu as pltpu

IN_FEATURE = 32      # == out_feature so the module's reshape / residual math is valid
OUT_FEATURE = 32
NUM_HEADS = 4
FFN_DIM = 64
EPS = 1e-5           # nn.LayerNorm default


def _layer_norm(z, gamma, beta):
    mean = jnp.mean(z, axis=-1, keepdims=True)
    var = jnp.mean((z - mean) ** 2, axis=-1, keepdims=True)
    return (z - mean) * jax.lax.rsqrt(var + EPS) * gamma + beta


# ----------------------------- fused kernel ----------------------------------

def _encoder_layer_kernel(q_ref, k_ref, v_ref,
                          wq_ref, wk_ref, wv_ref,
                          wo_ref, bo_ref, g1_ref, be1_ref,
                          w1_ref, bf1_ref, w2_ref, bf2_ref, g2_ref, be2_ref,
                          out_ref, p_ref,
                          ctx_ref,
                          *, num_heads, seq_per_head, scale):
    """One batch element per grid step; whole EncoderLayer stays in VMEM/vregs."""
    q = q_ref[...]            # (S, F)  -- also the residual for the attention block
    k = k_ref[...]
    v = v_ref[...]

    # q/k/v projections: torch.matmul(x, w).
    qp = jnp.dot(q, wq_ref[...], preferred_element_type=jnp.float32)
    kp = jnp.dot(k, wk_ref[...], preferred_element_type=jnp.float32)
    vp = jnp.dot(v, wv_ref[...], preferred_element_type=jnp.float32)

    # --- ScaledDotProductAttention, block-diagonal per (batch, head) group ---
    # The reference .view(B*H, -1, out_f) makes each head a contiguous group of
    # `seq_per_head` rows, so we process those row groups directly: no dense
    # (B*S, B*S) scores, no mask, and only the (B*H, T, T) probs are stored.
    # TODO(synk): attn_mask path and Dropout are omitted — EncoderLayer passes
    # attn_mask=None and dropout=0.0, so both are identity here.
    T = seq_per_head
    for h in range(num_heads):                      # static unroll (H = 4)
        lo, hi = h * T, (h + 1) * T
        qh = qp[lo:hi, :]                            # (T, F)
        kh = kp[lo:hi, :]
        vh = vp[lo:hi, :]
        s = jax.lax.dot_general(qh, kh, (((1,), (1,)), ((), ())),
                                preferred_element_type=jnp.float32) * scale
        m = jnp.max(s, axis=-1, keepdims=True)
        e = jnp.exp(s - m)
        denom = jnp.sum(e, axis=-1, keepdims=True)
        ph = e * pl.reciprocal(denom, approx=True)   # softmax(dim=2), EUP recip
        p_ref[h, :, :] = ph
        ctx_ref[lo:hi, :] = jnp.dot(ph, vh, preferred_element_type=jnp.float32)

    ctx = ctx_ref[...]                               # (S, F)

    # --- linear_final(context) + residual(query) + LayerNorm ---
    y = jnp.dot(ctx, wo_ref[...], preferred_element_type=jnp.float32) + bo_ref[...]
    z1 = _layer_norm(q + y, g1_ref[...], be1_ref[...])

    # --- PositionalWiseFeedForward: 1x1 Conv1d == per-position matmul ---
    hdn = jnp.dot(z1, w1_ref[...], preferred_element_type=jnp.float32) + bf1_ref[...]
    hdn = jnp.maximum(hdn, 0.0)
    y2 = jnp.dot(hdn, w2_ref[...], preferred_element_type=jnp.float32) + bf2_ref[...]
    out_ref[...] = _layer_norm(z1 + y2, g2_ref[...], be2_ref[...])


# ----------------------------- wrapper ----------------------------------------

@jax.jit
def encoder_layer(q, k, v, params):
    B, S, F = q.shape
    H = NUM_HEADS
    assert F == IN_FEATURE and IN_FEATURE == OUT_FEATURE, (
        "reference module's reshape/residual math requires in_feature == out_feature")
    assert S % H == 0, "reference .view splits the sequence axis across heads"
    T = S // H
    # Matches the reference exactly: (key.size(-1) // num_heads) ** (-0.5).
    scale = float((OUT_FEATURE // H) ** (-0.5))

    q2 = q.reshape(B * S, F)
    k2 = k.reshape(B * S, F)
    v2 = v.reshape(B * S, F)

    kern = functools.partial(_encoder_layer_kernel,
                             num_heads=H, seq_per_head=T, scale=scale)

    # Activations: one batch element per grid step.
    act_spec = pl.BlockSpec((S, F), lambda b: (b, 0))

    # Parameters: full-array blocks with constant index maps -> DMA'd once,
    # resident in VMEM across all grid steps.
    def full(shape):
        return pl.BlockSpec(shape, lambda b: (0,) * len(shape))

    in_specs = [
        act_spec, act_spec, act_spec,
        full((F, F)), full((F, F)), full((F, F)),          # wq, wk, wv
        full((F, F)), full((1, F)),                        # linear_final W^T, b
        full((1, F)), full((1, F)),                        # LN1 gamma, beta
        full((F, FFN_DIM)), full((1, FFN_DIM)),            # conv w1^T, b1
        full((FFN_DIM, F)), full((1, F)),                  # conv w2^T, b2
        full((1, F)), full((1, F)),                        # LN2 gamma, beta
    ]
    out_specs = (
        pl.BlockSpec((S, F), lambda b: (b, 0)),            # layer output rows
        pl.BlockSpec((H, T, T), lambda b: (b, 0, 0)),      # this batch's H prob blocks
    )

    out2, attn = pl.pallas_call(
        kern,
        grid=(B,),
        in_specs=in_specs,
        out_specs=out_specs,
        out_shape=(jax.ShapeDtypeStruct((B * S, F), jnp.float32),
                   jax.ShapeDtypeStruct((B * H, T, T), jnp.float32)),
        scratch_shapes=[pltpu.VMEM((S, F), jnp.float32)],  # per-step context buffer
        compiler_params=pltpu.CompilerParams(
            dimension_semantics=("parallel",)),            # 2 TCs on v7x
    )(q2, k2, v2,
      params["wq"], params["wk"], params["wv"],
      params["w_final_t"], params["b_final"], params["ln1_g"], params["ln1_b"],
      params["w1_t"], params["b1"], params["w2_t"], params["b2"],
      params["ln2_g"], params["ln2_b"])

    return out2.reshape(B, S, F), attn


# ----------------------------- params ----------------------------------------

def init_params(key):
    F, Dff = IN_FEATURE, FFN_DIM
    ks = jax.random.split(key, 8)
    p = {}
    # np.random.randn-style projection weights
    p["wq"] = jax.random.normal(ks[0], (F, F), jnp.float32)
    p["wk"] = jax.random.normal(ks[1], (F, F), jnp.float32)
    p["wv"] = jax.random.normal(ks[2], (F, F), jnp.float32)
    # nn.Linear(F, F): y = x @ W.T + b  (store W.T for the kernel)
    w_final = jax.random.normal(ks[3], (F, F), jnp.float32) * 0.05
    p["w_final_t"] = w_final.T
    p["b_final"] = (jax.random.normal(ks[4], (F,), jnp.float32) * 0.05).reshape(1, F)
    p["ln1_g"] = jnp.ones((1, F), jnp.float32)
    p["ln1_b"] = jnp.zeros((1, F), jnp.float32)
    # Conv1d(F, Dff, 1) weight (Dff, F, 1) -> matmul with W[:, :, 0].T
    w1 = jax.random.normal(ks[5], (Dff, F), jnp.float32) * 0.05
    p["w1_t"] = w1.T
    p["b1"] = (jax.random.normal(ks[6], (Dff,), jnp.float32) * 0.05).reshape(1, Dff)
    w2 = jax.random.normal(ks[7], (F, Dff), jnp.float32) * 0.05
    p["w2_t"] = w2.T
    p["b2"] = jnp.zeros((1, F), jnp.float32)
    p["ln2_g"] = jnp.ones((1, F), jnp.float32)
    p["ln2_b"] = jnp.zeros((1, F), jnp.float32)
    return p


# ----------------------------- pure-JAX reference -----------------------------

def _reference(q, k, v, params):
    """Direct transcription of the PyTorch forward (per-head view/bmm form)."""
    B, S, F = q.shape
    H = NUM_HEADS
    T = S // H
    hp = dict(precision=jax.lax.Precision.HIGHEST)

    def ln(z, g, b):
        mu = jnp.mean(z, -1, keepdims=True)
        var = jnp.mean((z - mu) ** 2, -1, keepdims=True)
        return (z - mu) * jax.lax.rsqrt(var + EPS) * g + b

    residual = q
    qp = jnp.matmul(q, params["wq"], **hp)
    kp = jnp.matmul(k, params["wk"], **hp)
    vp = jnp.matmul(v, params["wv"], **hp)
    qh = qp.reshape(B * H, T, F)
    kh = kp.reshape(B * H, T, F)
    vh = vp.reshape(B * H, T, F)
    scale = float((F // H) ** (-0.5))
    s = jnp.einsum("bqd,bkd->bqk", qh, kh, **hp) * scale
    p = jax.nn.softmax(s, axis=2)
    ctx = jnp.einsum("bqk,bkd->bqd", p, vh, **hp).reshape(B, S, F)
    out = jnp.matmul(ctx, params["w_final_t"], **hp) + params["b_final"]
    z1 = ln(residual + out, params["ln1_g"], params["ln1_b"])
    h = jax.nn.relu(jnp.matmul(z1, params["w1_t"], **hp) + params["b1"])
    y2 = jnp.matmul(h, params["w2_t"], **hp) + params["b2"]
    z2 = ln(z1 + y2, params["ln2_g"], params["ln2_b"])
    return z2, p


if __name__ == "__main__":
    key = jax.random.PRNGKey(0)
    kparam, kq, kk, kv = jax.random.split(key, 4)
    params = init_params(kparam)

    B, S = 2, 8
    q = jax.random.normal(kq, (B, S, IN_FEATURE), jnp.float32)
    k = jax.random.normal(kk, (B, S, IN_FEATURE), jnp.float32)
    v = jax.random.normal(kv, (B, S, IN_FEATURE), jnp.float32)

    output, attn = encoder_layer(q, k, v, params)
    jax.block_until_ready((output, attn))

    assert output.shape == (B, S, IN_FEATURE)
    assert attn.shape == (B * NUM_HEADS, S // NUM_HEADS, S // NUM_HEADS)
    assert jnp.all(jnp.isfinite(output)) and jnp.all(jnp.isfinite(attn))

    ref_out, ref_attn = _reference(q, k, v, params)
    assert jnp.allclose(output, ref_out, rtol=1e-2, atol=1e-2), (
        "output mismatch, max abs err = %g" % float(jnp.max(jnp.abs(output - ref_out))))
    assert jnp.allclose(attn, ref_attn, rtol=1e-2, atol=1e-2), (
        "attn mismatch, max abs err = %g" % float(jnp.max(jnp.abs(attn - ref_attn))))

    print("KERNEL_OK")
</pallas_src>

<mosaic_0001>
module attributes {stable_mosaic.version = 11 : i64} {
  func.func @_encoder_layer_kernel(%arg0: i32, %arg1: memref<8x32xf32, #tpu.memory_space<vmem>>, %arg2: memref<8x32xf32, #tpu.memory_space<vmem>>, %arg3: memref<8x32xf32, #tpu.memory_space<vmem>>, %arg4: memref<32x32xf32, #tpu.memory_space<vmem>>, %arg5: memref<32x32xf32, #tpu.memory_space<vmem>>, %arg6: memref<32x32xf32, #tpu.memory_space<vmem>>, %arg7: memref<32x32xf32, #tpu.memory_space<vmem>>, %arg8: memref<1x32xf32, #tpu.memory_space<vmem>>, %arg9: memref<1x32xf32, #tpu.memory_space<vmem>>, %arg10: memref<1x32xf32, #tpu.memory_space<vmem>>, %arg11: memref<32x64xf32, #tpu.memory_space<vmem>>, %arg12: memref<1x64xf32, #tpu.memory_space<vmem>>, %arg13: memref<64x32xf32, #tpu.memory_space<vmem>>, %arg14: memref<1x32xf32, #tpu.memory_space<vmem>>, %arg15: memref<1x32xf32, #tpu.memory_space<vmem>>, %arg16: memref<1x32xf32, #tpu.memory_space<vmem>>, %arg17: memref<8x32xf32, #tpu.memory_space<vmem>>, %arg18: memref<4x2x2xf32, #tpu.memory_space<vmem>>, %arg19: memref<8x32xf32, #tpu.memory_space<vmem>>) attributes {dimension_semantics = [#tpu.dimension_semantics<parallel>], iteration_bounds = array<i64: 2>, scalar_prefetch = 0 : i64, scratch_operands = 1 : i64, tpu.core_type = #tpu.core_type<tc>, window_params = [{transform_indices = @transform_0, window_bounds = array<i64: 8, 32>}, {transform_indices = @transform_1, window_bounds = array<i64: 8, 32>}, {transform_indices = @transform_2, window_bounds = array<i64: 8, 32>}, {pipeline_mode = #tpu.pipeline_mode<synchronous>, transform_indices = @transform_3, window_bounds = array<i64: 32, 32>}, {pipeline_mode = #tpu.pipeline_mode<synchronous>, transform_indices = @transform_4, window_bounds = array<i64: 32, 32>}, {pipeline_mode = #tpu.pipeline_mode<synchronous>, transform_indices = @transform_5, window_bounds = array<i64: 32, 32>}, {pipeline_mode = #tpu.pipeline_mode<synchronous>, transform_indices = @transform_6, window_bounds = array<i64: 32, 32>}, {pipeline_mode = #tpu.pipeline_mode<synchronous>, transform_indices = @transform_7, window_bounds = array<i64: 1, 32>}, {pipeline_mode = #tpu.pipeline_mode<synchronous>, transform_indices = @transform_8, window_bounds = array<i64: 1, 32>}, {pipeline_mode = #tpu.pipeline_mode<synchronous>, transform_indices = @transform_9, window_bounds = array<i64: 1, 32>}, {pipeline_mode = #tpu.pipeline_mode<synchronous>, transform_indices = @transform_10, window_bounds = array<i64: 32, 64>}, {pipeline_mode = #tpu.pipeline_mode<synchronous>, transform_indices = @transform_11, window_bounds = array<i64: 1, 64>}, {pipeline_mode = #tpu.pipeline_mode<synchronous>, transform_indices = @transform_12, window_bounds = array<i64: 64, 32>}, {pipeline_mode = #tpu.pipeline_mode<synchronous>, transform_indices = @transform_13, window_bounds = array<i64: 1, 32>}, {pipeline_mode = #tpu.pipeline_mode<synchronous>, transform_indices = @transform_14, window_bounds = array<i64: 1, 32>}, {pipeline_mode = #tpu.pipeline_mode<synchronous>, transform_indices = @transform_15, window_bounds = array<i64: 1, 32>}, {transform_indices = @transform_16, window_bounds = array<i64: 8, 32>}, {transform_indices = @transform_17, window_bounds = array<i64: 4, 2, 2>}]} {
    %c0 = arith.constant 0 : index
    %c0_0 = arith.constant 0 : index
    %0 = vector.load %arg1[%c0, %c0_0] : memref<8x32xf32, #tpu.memory_space<vmem>>, vector<8x32xf32>
    %c0_1 = arith.constant 0 : index
    %c0_2 = arith.constant 0 : index
    %1 = vector.load %arg2[%c0_1, %c0_2] : memref<8x32xf32, #tpu.memory_space<vmem>>, vector<8x32xf32>
    %c0_3 = arith.constant 0 : index
    %c0_4 = arith.constant 0 : index
    %2 = vector.load %arg3[%c0_3, %c0_4] : memref<8x32xf32, #tpu.memory_space<vmem>>, vector<8x32xf32>
    %c0_5 = arith.constant 0 : index
    %c0_6 = arith.constant 0 : index
    %3 = vector.load %arg4[%c0_5, %c0_6] : memref<32x32xf32, #tpu.memory_space<vmem>>, vector<32x32xf32>
    %cst = arith.constant dense<0.000000e+00> : vector<8x32xf32>
    %4 = tpu.matmul %0, %3, %cst {dimension_numbers = #tpu.dot_dimension_numbers<[1], [0], [0], [1], [0, 0, 1, 1], [], []>} : vector<8x32xf32>, vector<32x32xf32>, vector<8x32xf32> -> vector<8x32xf32>
    %c0_7 = arith.constant 0 : index
    %c0_8 = arith.constant 0 : index
    %5 = vector.load %arg5[%c0_7, %c0_8] : memref<32x32xf32, #tpu.memory_space<vmem>>, vector<32x32xf32>
    %cst_9 = arith.constant dense<0.000000e+00> : vector<8x32xf32>
    %6 = tpu.matmul %1, %5, %cst_9 {dimension_numbers = #tpu.dot_dimension_numbers<[1], [0], [0], [1], [0, 0, 1, 1], [], []>} : vector<8x32xf32>, vector<32x32xf32>, vector<8x32xf32> -> vector<8x32xf32>
    %c0_10 = arith.constant 0 : index
    %c0_11 = arith.constant 0 : index
    %7 = vector.load %arg6[%c0_10, %c0_11] : memref<32x32xf32, #tpu.memory_space<vmem>>, vector<32x32xf32>
    %cst_12 = arith.constant dense<0.000000e+00> : vector<8x32xf32>
    %8 = tpu.matmul %2, %7, %cst_12 {dimension_numbers = #tpu.dot_dimension_numbers<[1], [0], [0], [1], [0, 0, 1, 1], [], []>} : vector<8x32xf32>, vector<32x32xf32>, vector<8x32xf32> -> vector<8x32xf32>
    %9 = vector.extract_strided_slice %4 {offsets = [0, 0], sizes = [2, 32], strides = [1, 1]} : vector<8x32xf32> to vector<2x32xf32>
    %10 = vector.extract_strided_slice %6 {offsets = [0, 0], sizes = [2, 32], strides = [1, 1]} : vector<8x32xf32> to vector<2x32xf32>
    %11 = vector.extract_strided_slice %8 {offsets = [0, 0], sizes = [2, 32], strides = [1, 1]} : vector<8x32xf32> to vector<2x32xf32>
    %cst_13 = arith.constant dense<0.000000e+00> : vector<2x2xf32>
    %12 = tpu.matmul %9, %10, %cst_13 {dimension_numbers = #tpu.dot_dimension_numbers<[1], [1], [0], [0], [0, 0, 1, 0], [], []>} : vector<2x32xf32>, vector<2x32xf32>, vector<2x2xf32> -> vector<2x2xf32>
    %cst_14 = arith.constant 0.353553385 : f32
    %13 = vector.broadcast %cst_14 : f32 to vector<2x2xf32>
    %14 = arith.mulf %12, %13 : vector<2x2xf32>
    %cst_15 = arith.constant dense<0xFF800000> : vector<2xf32>
    %15 = vector.multi_reduction <maximumf>, %14, %cst_15 [1] : vector<2x2xf32> to vector<2xf32>
    %16 = vector.shape_cast %15 : vector<2xf32> to vector<2x1xf32>
    %17 = vector.broadcast %16 : vector<2x1xf32> to vector<2x2xf32>
    %18 = arith.subf %14, %17 : vector<2x2xf32>
    %19 = math.exp %18 : vector<2x2xf32>
    %cst_16 = arith.constant dense<0.000000e+00> : vector<2xf32>
    %20 = vector.multi_reduction <add>, %19, %cst_16 [1] : vector<2x2xf32> to vector<2xf32>
    %21 = vector.shape_cast %20 : vector<2xf32> to vector<2x1xf32>
    %22 = tpu.reciprocal %21 {approx = true} : vector<2x1xf32> -> vector<2x1xf32>
    %23 = vector.broadcast %22 : vector<2x1xf32> to vector<2x2xf32>
    %24 = arith.mulf %19, %23 : vector<2x2xf32>
    %c0_17 = arith.constant 0 : index
    %c0_18 = arith.constant 0 : index
    %c0_19 = arith.constant 0 : index
    %25 = vector.load %arg18[%c0_17, %c0_18, %c0_19] : memref<4x2x2xf32, #tpu.memory_space<vmem>>, vector<1x2x2xf32>
    %26 = vector.shape_cast %25 : vector<1x2x2xf32> to vector<2x2xf32>
    %27 = vector.shape_cast %24 : vector<2x2xf32> to vector<1x2x2xf32>
    tpu.vector_store %arg18[%c0_17, %c0_18, %c0_19], %27 {strides = array<i32>} : memref<4x2x2xf32, #tpu.memory_space<vmem>>, vector<1x2x2xf32>,
    %cst_20 = arith.constant dense<0.000000e+00> : vector<2x32xf32>
    %28 = tpu.matmul %24, %11, %cst_20 {dimension_numbers = #tpu.dot_dimension_numbers<[1], [0], [0], [1], [0, 0, 1, 1], [], []>} : vector<2x2xf32>, vector<2x32xf32>, vector<2x32xf32> -> vector<2x32xf32>
    %c0_21 = arith.constant 0 : index
    %c0_22 = arith.constant 0 : index
    %29 = vector.load %arg19[%c0_21, %c0_22] : memref<8x32xf32, #tpu.memory_space<vmem>>, vector<2x32xf32>
    tpu.vector_store %arg19[%c0_21, %c0_22], %28 {strides = array<i32>} : memref<8x32xf32, #tpu.memory_space<vmem>>, vector<2x32xf32>,
    %30 = vector.extract_strided_slice %4 {offsets = [2, 0], sizes = [2, 32], strides = [1, 1]} : vector<8x32xf32> to vector<2x32xf32>
    %31 = vector.extract_strided_slice %6 {offsets = [2, 0], sizes = [2, 32], strides = [1, 1]} : vector<8x32xf32> to vector<2x32xf32>
    %32 = vector.extract_strided_slice %8 {offsets = [2, 0], sizes = [2, 32], strides = [1, 1]} : vector<8x32xf32> to vector<2x32xf32>
    %cst_23 = arith.constant dense<0.000000e+00> : vector<2x2xf32>
    %33 = tpu.matmul %30, %31, %cst_23 {dimension_numbers = #tpu.dot_dimension_numbers<[1], [1], [0], [0], [0, 0, 1, 0], [], []>} : vector<2x32xf32>, vector<2x32xf32>, vector<2x2xf32> -> vector<2x2xf32>
    %cst_24 = arith.constant 0.353553385 : f32
    %34 = vector.broadcast %cst_24 : f32 to vector<2x2xf32>
    %35 = arith.mulf %33, %34 : vector<2x2xf32>
    %cst_25 = arith.constant dense<0xFF800000> : vector<2xf32>
    %36 = vector.multi_reduction <maximumf>, %35, %cst_25 [1] : vector<2x2xf32> to vector<2xf32>
    %37 = vector.shape_cast %36 : vector<2xf32> to vector<2x1xf32>
    %38 = vector.broadcast %37 : vector<2x1xf32> to vector<2x2xf32>
    %39 = arith.subf %35, %38 : vector<2x2xf32>
    %40 = math.exp %39 : vector<2x2xf32>
    %cst_26 = arith.constant dense<0.000000e+00> : vector<2xf32>
    %41 = vector.multi_reduction <add>, %40, %cst_26 [1] : vector<2x2xf32> to vector<2xf32>
    %42 = vector.shape_cast %41 : vector<2xf32> to vector<2x1xf32>
    %43 = tpu.reciprocal %42 {approx = true} : vector<2x1xf32> -> vector<2x1xf32>
    %44 = vector.broadcast %43 : vector<2x1xf32> to vector<2x2xf32>
    %45 = arith.mulf %40, %44 : vector<2x2xf32>
    %c1 = arith.constant 1 : index
    %c0_27 = arith.constant 0 : index
    %c0_28 = arith.constant 0 : index
    %46 = vector.load %arg18[%c1, %c0_27, %c0_28] : memref<4x2x2xf32, #tpu.memory_space<vmem>>, vector<1x2x2xf32>
    %47 = vector.shape_cast %46 : vector<1x2x2xf32> to vector<2x2xf32>
    %48 = vector.shape_cast %45 : vector<2x2xf32> to vector<1x2x2xf32>
    tpu.vector_store %arg18[%c1, %c0_27, %c0_28], %48 {strides = array<i32>} : memref<4x2x2xf32, #tpu.memory_space<vmem>>, vector<1x2x2xf32>,
    %cst_29 = arith.constant dense<0.000000e+00> : vector<2x32xf32>
    %49 = tpu.matmul %45, %32, %cst_29 {dimension_numbers = #tpu.dot_dimension_numbers<[1], [0], [0], [1], [0, 0, 1, 1], [], []>} : vector<2x2xf32>, vector<2x32xf32>, vector<2x32xf32> -> vector<2x32xf32>
    %c2 = arith.constant 2 : index
    %c0_30 = arith.constant 0 : index
    %50 = vector.load %arg19[%c2, %c0_30] : memref<8x32xf32, #tpu.memory_space<vmem>>, vector<2x32xf32>
    tpu.vector_store %arg19[%c2, %c0_30], %49 {strides = array<i32>} : memref<8x32xf32, #tpu.memory_space<vmem>>, vector<2x32xf32>,
    %51 = vector.extract_strided_slice %4 {offsets = [4, 0], sizes = [2, 32], strides = [1, 1]} : vector<8x32xf32> to vector<2x32xf32>
    %52 = vector.extract_strided_slice %6 {offsets = [4, 0], sizes = [2, 32], strides = [1, 1]} : vector<8x32xf32> to vector<2x32xf32>
    %53 = vector.extract_strided_slice %8 {offsets = [4, 0], sizes = [2, 32], strides = [1, 1]} : vector<8x32xf32> to vector<2x32xf32>
    %cst_31 = arith.constant dense<0.000000e+00> : vector<2x2xf32>
    %54 = tpu.matmul %51, %52, %cst_31 {dimension_numbers = #tpu.dot_dimension_numbers<[1], [1], [0], [0], [0, 0, 1, 0], [], []>} : vector<2x32xf32>, vector<2x32xf32>, vector<2x2xf32> -> vector<2x2xf32>
    %cst_32 = arith.constant 0.353553385 : f32
    %55 = vector.broadcast %cst_32 : f32 to vector<2x2xf32>
    %56 = arith.mulf %54, %55 : vector<2x2xf32>
    %cst_33 = arith.constant dense<0xFF800000> : vector<2xf32>
    %57 = vector.multi_reduction <maximumf>, %56, %cst_33 [1] : vector<2x2xf32> to vector<2xf32>
    %58 = vector.shape_cast %57 : vector<2xf32> to vector<2x1xf32>
    %59 = vector.broadcast %58 : vector<2x1xf32> to vector<2x2xf32>
    %60 = arith.subf %56, %59 : vector<2x2xf32>
    %61 = math.exp %60 : vector<2x2xf32>
    %cst_34 = arith.constant dense<0.000000e+00> : vector<2xf32>
    %62 = vector.multi_reduction <add>, %61, %cst_34 [1] : vector<2x2xf32> to vector<2xf32>
    %63 = vector.shape_cast %62 : vector<2xf32> to vector<2x1xf32>
    %64 = tpu.reciprocal %63 {approx = true} : vector<2x1xf32> -> vector<2x1xf32>
    %65 = vector.broadcast %64 : vector<2x1xf32> to vector<2x2xf32>
    %66 = arith.mulf %61, %65 : vector<2x2xf32>
    %c2_35 = arith.constant 2 : index
    %c0_36 = arith.constant 0 : index
    %c0_37 = arith.constant 0 : index
    %67 = vector.load %arg18[%c2_35, %c0_36, %c0_37] : memref<4x2x2xf32, #tpu.memory_space<vmem>>, vector<1x2x2xf32>
    %68 = vector.shape_cast %67 : vector<1x2x2xf32> to vector<2x2xf32>
    %69 = vector.shape_cast %66 : vector<2x2xf32> to vector<1x2x2xf32>
    tpu.vector_store %arg18[%c2_35, %c0_36, %c0_37], %69 {strides = array<i32>} : memref<4x2x2xf32, #tpu.memory_space<vmem>>, vector<1x2x2xf32>,
    %cst_38 = arith.constant dense<0.000000e+00> : vector<2x32xf32>
    %70 = tpu.matmul %66, %53, %cst_38 {dimension_numbers = #tpu.dot_dimension_numbers<[1], [0], [0], [1], [0, 0, 1, 1], [], []>} : vector<2x2xf32>, vector<2x32xf32>, vector<2x32xf32> -> vector<2x32xf32>
    %c4 = arith.constant 4 : index
    %c0_39 = arith.constant 0 : index
    %71 = vector.load %arg19[%c4, %c0_39] : memref<8x32xf32, #tpu.memory_space<vmem>>, vector<2x32xf32>
    tpu.vector_store %arg19[%c4, %c0_39], %70 {strides = array<i32>} : memref<8x32xf32, #tpu.memory_space<vmem>>, vector<2x32xf32>,
    %72 = vector.extract_strided_slice %4 {offsets = [6, 0], sizes = [2, 32], strides = [1, 1]} : vector<8x32xf32> to vector<2x32xf32>
    %73 = vector.extract_strided_slice %6 {offsets = [6, 0], sizes = [2, 32], strides = [1, 1]} : vector<8x32xf32> to vector<2x32xf32>
    %74 = vector.extract_strided_slice %8 {offsets = [6, 0], sizes = [2, 32], strides = [1, 1]} : vector<8x32xf32> to vector<2x32xf32>
    %cst_40 = arith.constant dense<0.000000e+00> : vector<2x2xf32>
    %75 = tpu.matmul %72, %73, %cst_40 {dimension_numbers = #tpu.dot_dimension_numbers<[1], [1], [0], [0], [0, 0, 1, 0], [], []>} : vector<2x32xf32>, vector<2x32xf32>, vector<2x2xf32> -> vector<2x2xf32>
    %cst_41 = arith.constant 0.353553385 : f32
    %76 = vector.broadcast %cst_41 : f32 to vector<2x2xf32>
    %77 = arith.mulf %75, %76 : vector<2x2xf32>
    %cst_42 = arith.constant dense<0xFF800000> : vector<2xf32>
    %78 = vector.multi_reduction <maximumf>, %77, %cst_42 [1] : vector<2x2xf32> to vector<2xf32>
    %79 = vector.shape_cast %78 : vector<2xf32> to vector<2x1xf32>
    %80 = vector.broadcast %79 : vector<2x1xf32> to vector<2x2xf32>
    %81 = arith.subf %77, %80 : vector<2x2xf32>
    %82 = math.exp %81 : vector<2x2xf32>
    %cst_43 = arith.constant dense<0.000000e+00> : vector<2xf32>
    %83 = vector.multi_reduction <add>, %82, %cst_43 [1] : vector<2x2xf32> to vector<2xf32>
    %84 = vector.shape_cast %83 : vector<2xf32> to vector<2x1xf32>
    %85 = tpu.reciprocal %84 {approx = true} : vector<2x1xf32> -> vector<2x1xf32>
    %86 = vector.broadcast %85 : vector<2x1xf32> to vector<2x2xf32>
    %87 = arith.mulf %82, %86 : vector<2x2xf32>
    %c3 = arith.constant 3 : index
    %c0_44 = arith.constant 0 : index
    %c0_45 = arith.constant 0 : index
    %88 = vector.load %arg18[%c3, %c0_44, %c0_45] : memref<4x2x2xf32, #tpu.memory_space<vmem>>, vector<1x2x2xf32>
    %89 = vector.shape_cast %88 : vector<1x2x2xf32> to vector<2x2xf32>
    %90 = vector.shape_cast %87 : vector<2x2xf32> to vector<1x2x2xf32>
    tpu.vector_store %arg18[%c3, %c0_44, %c0_45], %90 {strides = array<i32>} : memref<4x2x2xf32, #tpu.memory_space<vmem>>, vector<1x2x2xf32>,
    %cst_46 = arith.constant dense<0.000000e+00> : vector<2x32xf32>
    %91 = tpu.matmul %87, %74, %cst_46 {dimension_numbers = #tpu.dot_dimension_numbers<[1], [0], [0], [1], [0, 0, 1, 1], [], []>} : vector<2x2xf32>, vector<2x32xf32>, vector<2x32xf32> -> vector<2x32xf32>
    %c6 = arith.constant 6 : index
    %c0_47 = arith.constant 0 : index
    %92 = vector.load %arg19[%c6, %c0_47] : memref<8x32xf32, #tpu.memory_space<vmem>>, vector<2x32xf32>
    tpu.vector_store %arg19[%c6, %c0_47], %91 {strides = array<i32>} : memref<8x32xf32, #tpu.memory_space<vmem>>, vector<2x32xf32>,
    %c0_48 = arith.constant 0 : index
    %c0_49 = arith.constant 0 : index
    %93 = vector.load %arg19[%c0_48, %c0_49] : memref<8x32xf32, #tpu.memory_space<vmem>>, vector<8x32xf32>
    %c0_50 = arith.constant 0 : index
    %c0_51 = arith.constant 0 : index
    %94 = vector.load %arg7[%c0_50, %c0_51] : memref<32x32xf32, #tpu.memory_space<vmem>>, vector<32x32xf32>
    %cst_52 = arith.constant dense<0.000000e+00> : vector<8x32xf32>
    %95 = tpu.matmul %93, %94, %cst_52 {dimension_numbers = #tpu.dot_dimension_numbers<[1], [0], [0], [1], [0, 0, 1, 1], [], []>} : vector<8x32xf32>, vector<32x32xf32>, vector<8x32xf32> -> vector<8x32xf32>
    %c0_53 = arith.constant 0 : index
    %c0_54 = arith.constant 0 : index
    %96 = vector.load %arg8[%c0_53, %c0_54] : memref<1x32xf32, #tpu.memory_space<vmem>>, vector<1x32xf32>
    %97 = vector.broadcast %96 : vector<1x32xf32> to vector<8x32xf32>
    %98 = arith.addf %95, %97 : vector<8x32xf32>
    %99 = arith.addf %0, %98 : vector<8x32xf32>
    %c0_55 = arith.constant 0 : index
    %c0_56 = arith.constant 0 : index
    %100 = vector.load %arg9[%c0_55, %c0_56] : memref<1x32xf32, #tpu.memory_space<vmem>>, vector<1x32xf32>
    %c0_57 = arith.constant 0 : index
    %c0_58 = arith.constant 0 : index
    %101 = vector.load %arg10[%c0_57, %c0_58] : memref<1x32xf32, #tpu.memory_space<vmem>>, vector<1x32xf32>
    %cst_59 = arith.constant dense<0.000000e+00> : vector<8xf32>
    %102 = vector.multi_reduction <add>, %99, %cst_59 [1] : vector<8x32xf32> to vector<8xf32>
    %103 = vector.shape_cast %102 : vector<8xf32> to vector<8x1xf32>
    %cst_60 = arith.constant 3.200000e+01 : f32
    %104 = vector.broadcast %cst_60 : f32 to vector<8x1xf32>
    %105 = arith.divf %103, %104 : vector<8x1xf32>
    %106 = vector.broadcast %105 : vector<8x1xf32> to vector<8x32xf32>
    %107 = arith.subf %99, %106 : vector<8x32xf32>
    %108 = arith.mulf %107, %107 : vector<8x32xf32>
    %cst_61 = arith.constant dense<0.000000e+00> : vector<8xf32>
    %109 = vector.multi_reduction <add>, %108, %cst_61 [1] : vector<8x32xf32> to vector<8xf32>
    %110 = vector.shape_cast %109 : vector<8xf32> to vector<8x1xf32>
    %cst_62 = arith.constant 3.200000e+01 : f32
    %111 = vector.broadcast %cst_62 : f32 to vector<8x1xf32>
    %112 = arith.divf %110, %111 : vector<8x1xf32>
    %113 = vector.broadcast %105 : vector<8x1xf32> to vector<8x32xf32>
    %114 = arith.subf %99, %113 : vector<8x32xf32>
    %cst_63 = arith.constant 9.99999974E-6 : f32
    %115 = vector.broadcast %cst_63 : f32 to vector<8x1xf32>
    %116 = arith.addf %112, %115 : vector<8x1xf32>
    %117 = math.rsqrt %116 : vector<8x1xf32>
    %118 = vector.broadcast %117 : vector<8x1xf32> to vector<8x32xf32>
    %119 = arith.mulf %114, %118 : vector<8x32xf32>
    %120 = vector.broadcast %100 : vector<1x32xf32> to vector<8x32xf32>
    %121 = arith.mulf %119, %120 : vector<8x32xf32>
    %122 = vector.broadcast %101 : vector<1x32xf32> to vector<8x32xf32>
    %123 = arith.addf %121, %122 : vector<8x32xf32>
    %c0_64 = arith.constant 0 : index
    %c0_65 = arith.constant 0 : index
    %124 = vector.load %arg11[%c0_64, %c0_65] : memref<32x64xf32, #tpu.memory_space<vmem>>, vector<32x64xf32>
    %cst_66 = arith.constant dense<0.000000e+00> : vector<8x64xf32>
    %125 = tpu.matmul %123, %124, %cst_66 {dimension_numbers = #tpu.dot_dimension_numbers<[1], [0], [0], [1], [0, 0, 1, 1], [], []>} : vector<8x32xf32>, vector<32x64xf32>, vector<8x64xf32> -> vector<8x64xf32>
    %c0_67 = arith.constant 0 : index
    %c0_68 = arith.constant 0 : index
    %126 = vector.load %arg12[%c0_67, %c0_68] : memref<1x64xf32, #tpu.memory_space<vmem>>, vector<1x64xf32>
    %127 = vector.broadcast %126 : vector<1x64xf32> to vector<8x64xf32>
    %128 = arith.addf %125, %127 : vector<8x64xf32>
    %cst_69 = arith.constant 0.000000e+00 : f32
    %129 = vector.broadcast %cst_69 : f32 to vector<8x64xf32>
    %130 = arith.maximumf %128, %129 : vector<8x64xf32>
    %c0_70 = arith.constant 0 : index
    %c0_71 = arith.constant 0 : index
    %131 = vector.load %arg13[%c0_70, %c0_71] : memref<64x32xf32, #tpu.memory_space<vmem>>, vector<64x32xf32>
    %cst_72 = arith.constant dense<0.000000e+00> : vector<8x32xf32>
    %132 = tpu.matmul %130, %131, %cst_72 {dimension_numbers = #tpu.dot_dimension_numbers<[1], [0], [0], [1], [0, 0, 1, 1], [], []>} : vector<8x64xf32>, vector<64x32xf32>, vector<8x32xf32> -> vector<8x32xf32>
    %c0_73 = arith.constant 0 : index
    %c0_74 = arith.constant 0 : index
    %133 = vector.load %arg14[%c0_73, %c0_74] : memref<1x32xf32, #tpu.memory_space<vmem>>, vector<1x32xf32>
    %134 = vector.broadcast %133 : vector<1x32xf32> to vector<8x32xf32>
    %135 = arith.addf %132, %134 : vector<8x32xf32>
    %136 = arith.addf %123, %135 : vector<8x32xf32>
    %c0_75 = arith.constant 0 : index
    %c0_76 = arith.constant 0 : index
    %137 = vector.load %arg15[%c0_75, %c0_76] : memref<1x32xf32, #tpu.memory_space<vmem>>, vector<1x32xf32>
    %c0_77 = arith.constant 0 : index
    %c0_78 = arith.constant 0 : index
    %138 = vector.load %arg16[%c0_77, %c0_78] : memref<1x32xf32, #tpu.memory_space<vmem>>, vector<1x32xf32>
    %cst_79 = arith.constant dense<0.000000e+00> : vector<8xf32>
    %139 = vector.multi_reduction <add>, %136, %cst_79 [1] : vector<8x32xf32> to vector<8xf32>
    %140 = vector.shape_cast %139 : vector<8xf32> to vector<8x1xf32>
    %cst_80 = arith.constant 3.200000e+01 : f32
    %141 = vector.broadcast %cst_80 : f32 to vector<8x1xf32>
    %142 = arith.divf %140, %141 : vector<8x1xf32>
    %143 = vector.broadcast %142 : vector<8x1xf32> to vector<8x32xf32>
    %144 = arith.subf %136, %143 : vector<8x32xf32>
    %145 = arith.mulf %144, %144 : vector<8x32xf32>
    %cst_81 = arith.constant dense<0.000000e+00> : vector<8xf32>
    %146 = vector.multi_reduction <add>, %145, %cst_81 [1] : vector<8x32xf32> to vector<8xf32>
    %147 = vector.shape_cast %146 : vector<8xf32> to vector<8x1xf32>
    %cst_82 = arith.constant 3.200000e+01 : f32
    %148 = vector.broadcast %cst_82 : f32 to vector<8x1xf32>
    %149 = arith.divf %147, %148 : vector<8x1xf32>
    %150 = vector.broadcast %142 : vector<8x1xf32> to vector<8x32xf32>
    %151 = arith.subf %136, %150 : vector<8x32xf32>
    %cst_83 = arith.constant 9.99999974E-6 : f32
    %152 = vector.broadcast %cst_83 : f32 to vector<8x1xf32>
    %153 = arith.addf %149, %152 : vector<8x1xf32>
    %154 = math.rsqrt %153 : vector<8x1xf32>
    %155 = vector.broadcast %154 : vector<8x1xf32> to vector<8x32xf32>
    %156 = arith.mulf %151, %155 : vector<8x32xf32>
    %157 = vector.broadcast %137 : vector<1x32xf32> to vector<8x32xf32>
    %158 = arith.mulf %156, %157 : vector<8x32xf32>
    %159 = vector.broadcast %138 : vector<1x32xf32> to vector<8x32xf32>
    %160 = arith.addf %158, %159 : vector<8x32xf32>
    %c0_84 = arith.constant 0 : index
    %c0_85 = arith.constant 0 : index
    %161 = vector.load %arg17[%c0_84, %c0_85] : memref<8x32xf32, #tpu.memory_space<vmem>>, vector<8x32xf32>
    tpu.vector_store %arg17[%c0_84, %c0_85], %160 {strides = array<i32>} : memref<8x32xf32, #tpu.memory_space<vmem>>, vector<8x32xf32>,
    return
  }
  func.func @transform_0(%arg0: i32) -> (i32, i32) {
    %c0_i32 = arith.constant 0 : i32
    %c0_i32_0 = arith.constant 0 : i32
    return %arg0, %c0_i32 : i32, i32
  }
  func.func @transform_1(%arg0: i32) -> (i32, i32) {
    %c0_i32 = arith.constant 0 : i32
    %c0_i32_0 = arith.constant 0 : i32
    return %arg0, %c0_i32 : i32, i32
  }
  func.func @transform_2(%arg0: i32) -> (i32, i32) {
    %c0_i32 = arith.constant 0 : i32
    %c0_i32_0 = arith.constant 0 : i32
    return %arg0, %c0_i32 : i32, i32
  }
  func.func @transform_3(%arg0: i32) -> (i32, i32) {
    %c0_i32 = arith.constant 0 : i32
    %c0_i32_0 = arith.constant 0 : i32
    %c0_i32_1 = arith.constant 0 : i32
    return %c0_i32, %c0_i32_0 : i32, i32
  }
  func.func @transform_4(%arg0: i32) -> (i32, i32) {
    %c0_i32 = arith.constant 0 : i32
    %c0_i32_0 = arith.constant 0 : i32
    %c0_i32_1 = arith.constant 0 : i32
    return %c0_i32, %c0_i32_0 : i32, i32
  }
  func.func @transform_5(%arg0: i32) -> (i32, i32) {
    %c0_i32 = arith.constant 0 : i32
    %c0_i32_0 = arith.constant 0 : i32
    %c0_i32_1 = arith.constant 0 : i32
    return %c0_i32, %c0_i32_0 : i32, i32
  }
  func.func @transform_6(%arg0: i32) -> (i32, i32) {
    %c0_i32 = arith.constant 0 : i32
    %c0_i32_0 = arith.constant 0 : i32
    %c0_i32_1 = arith.constant 0 : i32
    return %c0_i32, %c0_i32_0 : i32, i32
  }
  func.func @transform_7(%arg0: i32) -> (i32, i32) {
    %c0_i32 = arith.constant 0 : i32
    %c0_i32_0 = arith.constant 0 : i32
    %c0_i32_1 = arith.constant 0 : i32
    return %c0_i32, %c0_i32_0 : i32, i32
  }
  func.func @transform_8(%arg0: i32) -> (i32, i32) {
    %c0_i32 = arith.constant 0 : i32
    %c0_i32_0 = arith.constant 0 : i32
    %c0_i32_1 = arith.constant 0 : i32
    return %c0_i32, %c0_i32_0 : i32, i32
  }
  func.func @transform_9(%arg0: i32) -> (i32, i32) {
    %c0_i32 = arith.constant 0 : i32
    %c0_i32_0 = arith.constant 0 : i32
    %c0_i32_1 = arith.constant 0 : i32
    return %c0_i32, %c0_i32_0 : i32, i32
  }
  func.func @transform_10(%arg0: i32) -> (i32, i32) {
    %c0_i32 = arith.constant 0 : i32
    %c0_i32_0 = arith.constant 0 : i32
    %c0_i32_1 = arith.constant 0 : i32
    return %c0_i32, %c0_i32_0 : i32, i32
  }
  func.func @transform_11(%arg0: i32) -> (i32, i32) {
    %c0_i32 = arith.constant 0 : i32
    %c0_i32_0 = arith.constant 0 : i32
    %c0_i32_1 = arith.constant 0 : i32
    return %c0_i32, %c0_i32_0 : i32, i32
  }
  func.func @transform_12(%arg0: i32) -> (i32, i32) {
    %c0_i32 = arith.constant 0 : i32
    %c0_i32_0 = arith.constant 0 : i32
    %c0_i32_1 = arith.constant 0 : i32
    return %c0_i32, %c0_i32_0 : i32, i32
  }
  func.func @transform_13(%arg0: i32) -> (i32, i32) {
    %c0_i32 = arith.constant 0 : i32
    %c0_i32_0 = arith.constant 0 : i32
    %c0_i32_1 = arith.constant 0 : i32
    return %c0_i32, %c0_i32_0 : i32, i32
  }
  func.func @transform_14(%arg0: i32) -> (i32, i32) {
    %c0_i32 = arith.constant 0 : i32
    %c0_i32_0 = arith.constant 0 : i32
    %c0_i32_1 = arith.constant 0 : i32
    return %c0_i32, %c0_i32_0 : i32, i32
  }
  func.func @transform_15(%arg0: i32) -> (i32, i32) {
    %c0_i32 = arith.constant 0 : i32
    %c0_i32_0 = arith.constant 0 : i32
    %c0_i32_1 = arith.constant 0 : i32
    return %c0_i32, %c0_i32_0 : i32, i32
  }
  func.func @transform_16(%arg0: i32) -> (i32, i32) {
    %c0_i32 = arith.constant 0 : i32
    %c0_i32_0 = arith.constant 0 : i32
    return %arg0, %c0_i32 : i32, i32
  }
  func.func @transform_17(%arg0: i32) -> (i32, i32, i32) {
    %c0_i32 = arith.constant 0 : i32
    %c0_i32_0 = arith.constant 0 : i32
    %c0_i32_1 = arith.constant 0 : i32
    return %arg0, %c0_i32, %c0_i32_0 : i32, i32, i32
  }
}

</mosaic_0001>

<llo_original>
// kernel: encoder_layer.1
$region0: #{encoder_layer.1}
  #allocation0 [shape = 'u32[]', space=smem, size = 0x4, offset = 0x4, fixed_abs, tag = 'smem constant byte address 0x4 - core index']
  #allocation1 [shape = 'u32[144,128]{1,0:T(1,128)}', space=vmem, size = 0x12000, scoped, tag = 'internal scratch']
  #allocation2 [shape = 'f32[8,32]{1,0:T(8,128)}', space=vmem, size = 0x1000, scoped, tag = 'scratch operand']
  %s0 = inlined_call_operand.hbm [shape: f32[16,32], index: 0, kind: input, shape index: {}]
  %s1 = inlined_call_operand.hbm [shape: f32[16,32], index: 1, kind: input, shape index: {}]
  %s2 = inlined_call_operand.vmem [shape: f32[16,32], index: 2, kind: input, shape index: {}]
  %s3 = inlined_call_operand.vmem [shape: f32[32,32], index: 3, kind: input, shape index: {}]
  %s4 = inlined_call_operand.vmem [shape: f32[32,32], index: 4, kind: input, shape index: {}]
  %s5 = inlined_call_operand.vmem [shape: f32[32,32], index: 5, kind: input, shape index: {}]
  %s6 = inlined_call_operand.hbm [shape: f32[32,32], index: 6, kind: input, shape index: {}]
  %s7 = inlined_call_operand.vmem [shape: f32[1,32], index: 7, kind: input, shape index: {}]
  %s8 = inlined_call_operand.vmem [shape: f32[1,32], index: 8, kind: input, shape index: {}]
  %s9 = inlined_call_operand.vmem [shape: f32[1,32], index: 9, kind: input, shape index: {}]
  %s10 = inlined_call_operand.hbm [shape: f32[32,64], index: 10, kind: input, shape index: {}]
  %s11 = inlined_call_operand.vmem [shape: f32[1,64], index: 11, kind: input, shape index: {}]
  %s12 = inlined_call_operand.vmem [shape: f32[64,32], index: 12, kind: input, shape index: {}]
  %s13 = inlined_call_operand.vmem [shape: f32[1,32], index: 13, kind: input, shape index: {}]
  %s14 = inlined_call_operand.hbm [shape: f32[1,32], index: 14, kind: input, shape index: {}]
  %s15 = inlined_call_operand.hbm [shape: f32[1,32], index: 15, kind: input, shape index: {}]
  %s16 = inlined_call_operand.hbm [shape: f32[16,32], index: 16, kind: output, shape index: {0}]
  %s17 = inlined_call_operand.vmem [shape: f32[8,2,2], index: 17, kind: output, shape index: {1}]
  %18 = xla_tuple %s16, %s17
  %s19 = sld [smem:[#allocation0]]
  $region129: #{encoder_layer.1} parent=0
    _
  %s21 = ssub.s32 1, %s19
  %s22 = scalar_select 0, %s21, %s19
  $region1: #{encoder_layer.1} parent=0
    #allocation3 [shape = 'u8[8192]{0}', space=vmem, size = 0x2000, scoped, tag = 'input window, operand 0']
    #allocation4 [shape = 's32[2]{0}', space=sflag, size = 0x8, scoped, tag = 'scoped memory for encoder_layer.1']
    #allocation5 [shape = 's32[2]{0}', space=sflag, size = 0x8, scoped, tag = 'scoped memory for encoder_layer.1']
    #allocation6 [shape = 'u8[8192]{0}', space=vmem, size = 0x2000, scoped, tag = 'input window, operand 1']
    #allocation7 [shape = 's32[2]{0}', space=sflag, size = 0x8, scoped, tag = 'scoped memory for encoder_layer.1']
    #allocation8 [shape = 'u8[16384]{0}', space=vmem, size = 0x4000, scoped, tag = 'input window, operand 6, single buffered']
    #allocation9 [shape = 'u8[16384]{0}', space=vmem, size = 0x4000, scoped, tag = 'input window, operand 10, single buffered']
    #allocation10 [shape = 's32[1]{0}', space=sflag, size = 0x4, scoped, tag = 'scoped memory for encoder_layer.1']
    #allocation11 [shape = 'u8[512]{0}', space=vmem, size = 0x400, scoped, tag = 'input window, operand 14, single buffered']
    #allocation12 [shape = 'u8[512]{0}', space=vmem, size = 0x400, scoped, tag = 'input window, operand 15, single buffered']
    #allocation13 [shape = 's32[1]{0}', space=sflag, size = 0x4, scoped, tag = 'scoped memory for encoder_layer.1']
    #allocation14 [shape = 'u8[8192]{0}', space=vmem, size = 0x2000, scoped, tag = 'output window, operand 0']
    %23 = vsyncpa [#allocation4], 0
    %s24 = scalar_lea.sflag [#allocation4], 1
    %25 = vsyncpa %s24, 0
    %26 = vsyncpa [#allocation7], 0
    %s27 = scalar_lea.sflag [#allocation7], 1
    %28 = vsyncpa %s27, 0
    %29 = vsyncpa [#allocation10], 0
    %30 = vsyncpa [#allocation13], 0
    %31 = vsyncpa [#allocation5], 0
    %s32 = scalar_lea.sflag [#allocation5], 1
    %33 = vsyncpa %s32, 0
    loop: start=0, step=1, limit=4
    $region2: #{encoder_layer.1} parent=1 // loop_pre_header
      _
    $region3: #{encoder_layer.1} parent=1 // loop_header
      %s35 = sphi 0, %s39
      %p36 = scmp.ge.s32.totalorder %s35, 4
      %s45 = sphi 0, %s47
      %s48 = sphi 0, %s45
      %s49 = sphi 0, %s48
      %s65 = sphi 0, %s49
      %s71 = sphi 0, %s73
      %s74 = sphi 0, %s71
      %s75 = sphi 0, %s74
      %s91 = sphi 0, %s75
      %s97 = sphi 0, %s99
      %s100 = sphi 0, %s97
      %s101 = sphi 0, %s100
      %s117 = sphi 0, %s101
      %s121 = sphi 0, %s121
      %s123 = sphi 0, %s121
      %s124 = sphi 0, %s123
      %s138 = sphi 0, %s124
      %s142 = sphi 0, %s142
      %s144 = sphi 0, %s142
      %s145 = sphi 0, %s144
      %s159 = sphi 0, %s145
      %s163 = sphi 0, %s163
      %s165 = sphi 0, %s163
      %s166 = sphi 0, %s165
      %s180 = sphi 0, %s166
      %s184 = sphi 0, %s184
      %s186 = sphi 0, %s184
      %s187 = sphi 0, %s186
      %s201 = sphi 0, %s187
      %s205 = sphi 0, %s205
      %s207 = sphi 0, %s205
      %s208 = sphi 0, %s207
      %s222 = sphi 0, %s208
      %s226 = sphi 0, %s226
      %s228 = sphi 0, %s226
      %s229 = sphi 0, %s228
      %s243 = sphi 0, %s229
      %s247 = sphi 0, %s247
      %s249 = sphi 0, %s247
      %s250 = sphi 0, %s249
      %s264 = sphi 0, %s250
      %s268 = sphi 0, %s268
      %s270 = sphi 0, %s268
      %s271 = sphi 0, %s270
      %s285 = sphi 0, %s271
      %s289 = sphi 0, %s289
      %s291 = sphi 0, %s289
      %s292 = sphi 0, %s291
      %s306 = sphi 0, %s292
      %s310 = sphi 0, %s310
      %s312 = sphi 0, %s310
      %s313 = sphi 0, %s312
      %s327 = sphi 0, %s313
      %s331 = sphi 0, %s331
      %s333 = sphi 0, %s331
      %s334 = sphi 0, %s333
      %s348 = sphi 0, %s334
      %s352 = sphi 0, %s352
      %s354 = sphi 0, %s352
      %s355 = sphi 0, %s354
      %s369 = sphi 0, %s355
      %s373 = sphi 0, %s373
      %s375 = sphi 0, %s373
      %s376 = sphi 0, %s375
      %s390 = sphi 0, %s376
      %s396 = sphi 0, %s398
      %s399 = sphi 0, %s396
      %s400 = sphi 0, %s399
      %s416 = sphi 0, %s400
      %s422 = sphi 0, %s424
      %s425 = sphi 0, %s422
      %s426 = sphi 0, %s425
      %s442 = sphi 0, %s426
    $region4: #{encoder_layer.1} parent=1 // loop_header_branch
      %38 = sbr.rel (%p36) target = $region8
    $region5: #{encoder_layer.1} parent=1 // loop_body
      %s40 = ssub.s32 %s35, 1
      %s41 = ssub.s32 %s35, 2
      %s42 = sadd.s32 %s35, 1
      %s43 = ssub.s32 %s35, %s42
      %p44 = scmp.eq.s32.totalorder %s43, 0
      %s46 = sadd.s32 %s45, 1
      %s47 = scalar_select %p44, %s45, %s46
      %p50 = pneg %p44
      %p51 = scmp.eq.s32.totalorder %s35, 1
      %p52 = por %p50, %p51
      %p53 = scmp.ne.s32.totalorder %s45, %s48
      %p54 = scmp.eq.s32.totalorder %s35, 0
      %p55 = por %p53, %p54
      %p56 = scmp.ne.s32.totalorder %s45, %s48
      %p57 = scmp.eq.s32.totalorder %s40, 1
      %p58 = por %p56, %p57
      %p59 = scmp.ne.s32.totalorder %s48, %s49
      %p60 = scmp.eq.s32.totalorder %s40, 0
      %p61 = por %p59, %p60
      %p62 = scmp.ne.s32.totalorder %s48, %s49
      %p63 = scmp.eq.s32.totalorder %s41, 1
      %p64 = por %p62, %p63
      %p66 = scmp.ne.s32.totalorder %s49, %s65
      %p67 = scmp.eq.s32.totalorder %s41, 0
      %p68 = por %p66, %p67
      %s69 = ssub.s32 %s35, %s42
      %p70 = scmp.eq.s32.totalorder %s69, 0
      %s72 = sadd.s32 %s71, 1
      %s73 = scalar_select %p70, %s71, %s72
      %p76 = pneg %p70
      %p77 = scmp.eq.s32.totalorder %s35, 1
      %p78 = por %p76, %p77
      %p79 = scmp.ne.s32.totalorder %s71, %s74
      %p80 = scmp.eq.s32.totalorder %s35, 0
      %p81 = por %p79, %p80
      %p82 = scmp.ne.s32.totalorder %s71, %s74
      %p83 = scmp.eq.s32.totalorder %s40, 1
      %p84 = por %p82, %p83
      %p85 = scmp.ne.s32.totalorder %s74, %s75
      %p86 = scmp.eq.s32.totalorder %s40, 0
      %p87 = por %p85, %p86
      %p88 = scmp.ne.s32.totalorder %s74, %s75
      %p89 = scmp.eq.s32.totalorder %s41, 1
      %p90 = por %p88, %p89
      %p92 = scmp.ne.s32.totalorder %s75, %s91
      %p93 = scmp.eq.s32.totalorder %s41, 0
      %p94 = por %p92, %p93
      %s95 = ssub.s32 %s35, %s42
      %p96 = scmp.eq.s32.totalorder %s95, 0
      %s98 = sadd.s32 %s97, 1
      %s99 = scalar_select %p96, %s97, %s98
      %p102 = pneg %p96
      %p103 = scmp.eq.s32.totalorder %s35, 1
      %p104 = por %p102, %p103
      %p105 = scmp.ne.s32.totalorder %s97, %s100
      %p106 = scmp.eq.s32.totalorder %s35, 0
      %p107 = por %p105, %p106
      %p108 = scmp.ne.s32.totalorder %s97, %s100
      %p109 = scmp.eq.s32.totalorder %s40, 1
      %p110 = por %p108, %p109
      %p111 = scmp.ne.s32.totalorder %s100, %s101
      %p112 = scmp.eq.s32.totalorder %s40, 0
      %p113 = por %p111, %p112
      %p114 = scmp.ne.s32.totalorder %s100, %s101
      %p115 = scmp.eq.s32.totalorder %s41, 1
      %p116 = por %p114, %p115
      %p118 = scmp.ne.s32.totalorder %s101, %s117
      %p119 = scmp.eq.s32.totalorder %s41, 0
      %p120 = por %p118, %p119
      %s122 = sadd.s32 %s121, 1
      %p125 = scmp.eq.s32.totalorder %s35, 1
      %p126 = scmp.ne.s32.totalorder %s121, %s123
      %p127 = scmp.eq.s32.totalorder %s35, 0
      %p128 = por %p126, %p127
      %p129 = scmp.ne.s32.totalorder %s121, %s123
      %p130 = scmp.eq.s32.totalorder %s40, 1
      %p131 = por %p129, %p130
      %p132 = scmp.ne.s32.totalorder %s123, %s124
      %p133 = scmp.eq.s32.totalorder %s40, 0
      %p134 = por %p132, %p133
      %p135 = scmp.ne.s32.totalorder %s123, %s124
      %p136 = scmp.eq.s32.totalorder %s41, 1
      %p137 = por %p135, %p136
      %p139 = scmp.ne.s32.totalorder %s124, %s138
      %p140 = scmp.eq.s32.totalorder %s41, 0
      %p141 = por %p139, %p140
      %s143 = sadd.s32 %s142, 1
      %p146 = scmp.eq.s32.totalorder %s35, 1
      %p147 = scmp.ne.s32.totalorder %s142, %s144
      %p148 = scmp.eq.s32.totalorder %s35, 0
      %p149 = por %p147, %p148
      %p150 = scmp.ne.s32.totalorder %s142, %s144
      %p151 = scmp.eq.s32.totalorder %s40, 1
      %p152 = por %p150, %p151
      %p153 = scmp.ne.s32.totalorder %s144, %s145
      %p154 = scmp.eq.s32.totalorder %s40, 0
      %p155 = por %p153, %p154
      %p156 = scmp.ne.s32.totalorder %s144, %s145
      %p157 = scmp.eq.s32.totalorder %s41, 1
      %p158 = por %p156, %p157
      %p160 = scmp.ne.s32.totalorder %s145, %s159
      %p161 = scmp.eq.s32.totalorder %s41, 0
      %p162 = por %p160, %p161
      %s164 = sadd.s32 %s163, 1
      %p167 = scmp.eq.s32.totalorder %s35, 1
      %p168 = scmp.ne.s32.totalorder %s163, %s165
      %p169 = scmp.eq.s32.totalorder %s35, 0
      %p170 = por %p168, %p169
      %p171 = scmp.ne.s32.totalorder %s163, %s165
      %p172 = scmp.eq.s32.totalorder %s40, 1
      %p173 = por %p171, %p172
      %p174 = scmp.ne.s32.totalorder %s165, %s166
      %p175 = scmp.eq.s32.totalorder %s40, 0
      %p176 = por %p174, %p175
      %p177 = scmp.ne.s32.totalorder %s165, %s166
      %p178 = scmp.eq.s32.totalorder %s41, 1
      %p179 = por %p177, %p178
      %p181 = scmp.ne.s32.totalorder %s166, %s180
      %p182 = scmp.eq.s32.totalorder %s41, 0
      %p183 = por %p181, %p182
      %s185 = sadd.s32 %s184, 1
      %p188 = scmp.eq.s32.totalorder %s35, 1
      %p189 = scmp.ne.s32.totalorder %s184, %s186
      %p190 = scmp.eq.s32.totalorder %s35, 0
      %p191 = por %p189, %p190
      %p192 = scmp.ne.s32.totalorder %s184, %s186
      %p193 = scmp.eq.s32.totalorder %s40, 1
      %p194 = por %p192, %p193
      %p195 = scmp.ne.s32.totalorder %s186, %s187
      %p196 = scmp.eq.s32.totalorder %s40, 0
      %p197 = por %p195, %p196
      %p198 = scmp.ne.s32.totalorder %s186, %s187
      %p199 = scmp.eq.s32.totalorder %s41, 1
      %p200 = por %p198, %p199
      %p202 = scmp.ne.s32.totalorder %s187, %s201
      %p203 = scmp.eq.s32.totalorder %s41, 0
      %p204 = por %p202, %p203
      %s206 = sadd.s32 %s205, 1
      %p209 = scmp.eq.s32.totalorder %s35, 1
      %p210 = scmp.ne.s32.totalorder %s205, %s207
      %p211 = scmp.eq.s32.totalorder %s35, 0
      %p212 = por %p210, %p211
      %p213 = scmp.ne.s32.totalorder %s205, %s207
      %p214 = scmp.eq.s32.totalorder %s40, 1
      %p215 = por %p213, %p214
      %p216 = scmp.ne.s32.totalorder %s207, %s208
      %p217 = scmp.eq.s32.totalorder %s40, 0
      %p218 = por %p216, %p217
      %p219 = scmp.ne.s32.totalorder %s207, %s208
      %p220 = scmp.eq.s32.totalorder %s41, 1
      %p221 = por %p219, %p220
      %p223 = scmp.ne.s32.totalorder %s208, %s222
      %p224 = scmp.eq.s32.totalorder %s41, 0
      %p225 = por %p223, %p224
      %s227 = sadd.s32 %s226, 1
      %p230 = scmp.eq.s32.totalorder %s35, 1
      %p231 = scmp.ne.s32.totalorder %s226, %s228
      %p232 = scmp.eq.s32.totalorder %s35, 0
      %p233 = por %p231, %p232
      %p234 = scmp.ne.s32.totalorder %s226, %s228
      %p235 = scmp.eq.s32.totalorder %s40, 1
      %p236 = por %p234, %p235
      %p237 = scmp.ne.s32.totalorder %s228, %s229
      %p238 = scmp.eq.s32.totalorder %s40, 0
      %p239 = por %p237, %p238
      %p240 = scmp.ne.s32.totalorder %s228, %s229
      %p241 = scmp.eq.s32.totalorder %s41, 1
      %p242 = por %p240, %p241
      %p244 = scmp.ne.s32.totalorder %s229, %s243
      %p245 = scmp.eq.s32.totalorder %s41, 0
      %p246 = por %p244, %p245
      %s248 = sadd.s32 %s247, 1
      %p251 = scmp.eq.s32.totalorder %s35, 1
      %p252 = scmp.ne.s32.totalorder %s247, %s249
      %p253 = scmp.eq.s32.totalorder %s35, 0
      %p254 = por %p252, %p253
      %p255 = scmp.ne.s32.totalorder %s247, %s249
      %p256 = scmp.eq.s32.totalorder %s40, 1
      %p257 = por %p255, %p256
      %p258 = scmp.ne.s32.totalorder %s249, %s250
      %p259 = scmp.eq.s32.totalorder %s40, 0
      %p260 = por %p258, %p259
      %p261 = scmp.ne.s32.totalorder %s249, %s250
      %p262 = scmp.eq.s32.totalorder %s41, 1
      %p263 = por %p261, %p262
      %p265 = scmp.ne.s32.totalorder %s250, %s264
      %p266 = scmp.eq.s32.totalorder %s41, 0
      %p267 = por %p265, %p266
      %s269 = sadd.s32 %s268, 1
      %p272 = scmp.eq.s32.totalorder %s35, 1
      %p273 = scmp.ne.s32.totalorder %s268, %s270
      %p274 = scmp.eq.s32.totalorder %s35, 0
      %p275 = por %p273, %p274
      %p276 = scmp.ne.s32.totalorder %s268, %s270
      %p277 = scmp.eq.s32.totalorder %s40, 1
      %p278 = por %p276, %p277
      %p279 = scmp.ne.s32.totalorder %s270, %s271
      %p280 = scmp.eq.s32.totalorder %s40, 0
      %p281 = por %p279, %p280
      %p282 = scmp.ne.s32.totalorder %s270, %s271
      %p283 = scmp.eq.s32.totalorder %s41, 1
      %p284 = por %p282, %p283
      %p286 = scmp.ne.s32.totalorder %s271, %s285
      %p287 = scmp.eq.s32.totalorder %s41, 0
      %p288 = por %p286, %p287
      %s290 = sadd.s32 %s289, 1
      %p293 = scmp.eq.s32.totalorder %s35, 1
      %p294 = scmp.ne.s32.totalorder %s289, %s291
      %p295 = scmp.eq.s32.totalorder %s35, 0
      %p296 = por %p294, %p295
      %p297 = scmp.ne.s32.totalorder %s289, %s291
      %p298 = scmp.eq.s32.totalorder %s40, 1
      %p299 = por %p297, %p298
      %p300 = scmp.ne.s32.totalorder %s291, %s292
      %p301 = scmp.eq.s32.totalorder %s40, 0
      %p302 = por %p300, %p301
      %p303 = scmp.ne.s32.totalorder %s291, %s292
      %p304 = scmp.eq.s32.totalorder %s41, 1
      %p305 = por %p303, %p304
      %p307 = scmp.ne.s32.totalorder %s292, %s306
      %p308 = scmp.eq.s32.totalorder %s41, 0
      %p309 = por %p307, %p308
      %s311 = sadd.s32 %s310, 1
      %p314 = scmp.eq.s32.totalorder %s35, 1
      %p315 = scmp.ne.s32.totalorder %s310, %s312
      %p316 = scmp.eq.s32.totalorder %s35, 0
      %p317 = por %p315, %p316
      %p318 = scmp.ne.s32.totalorder %s310, %s312
      %p319 = scmp.eq.s32.totalorder %s40, 1
      %p320 = por %p318, %p319
      %p321 = scmp.ne.s32.totalorder %s312, %s313
      %p322 = scmp.eq.s32.totalorder %s40, 0
      %p323 = por %p321, %p322
      %p324 = scmp.ne.s32.totalorder %s312, %s313
      %p325 = scmp.eq.s32.totalorder %s41, 1
      %p326 = por %p324, %p325
      %p328 = scmp.ne.s32.totalorder %s313, %s327
      %p329 = scmp.eq.s32.totalorder %s41, 0
      %p330 = por %p328, %p329
      %s332 = sadd.s32 %s331, 1
      %p335 = scmp.eq.s32.totalorder %s35, 1
      %p336 = scmp.ne.s32.totalorder %s331, %s333
      %p337 = scmp.eq.s32.totalorder %s35, 0
      %p338 = por %p336, %p337
      %p339 = scmp.ne.s32.totalorder %s331, %s333
      %p340 = scmp.eq.s32.totalorder %s40, 1
      %p341 = por %p339, %p340
      %p342 = scmp.ne.s32.totalorder %s333, %s334
      %p343 = scmp.eq.s32.totalorder %s40, 0
      %p344 = por %p342, %p343
      %p345 = scmp.ne.s32.totalorder %s333, %s334
      %p346 = scmp.eq.s32.totalorder %s41, 1
      %p347 = por %p345, %p346
      %p349 = scmp.ne.s32.totalorder %s334, %s348
      %p350 = scmp.eq.s32.totalorder %s41, 0
      %p351 = por %p349, %p350
      %s353 = sadd.s32 %s352, 1
      %p356 = scmp.eq.s32.totalorder %s35, 1
      %p357 = scmp.ne.s32.totalorder %s352, %s354
      %p358 = scmp.eq.s32.totalorder %s35, 0
      %p359 = por %p357, %p358
      %p360 = scmp.ne.s32.totalorder %s352, %s354
      %p361 = scmp.eq.s32.totalorder %s40, 1
      %p362 = por %p360, %p361
      %p363 = scmp.ne.s32.totalorder %s354, %s355
      %p364 = scmp.eq.s32.totalorder %s40, 0
      %p365 = por %p363, %p364
      %p366 = scmp.ne.s32.totalorder %s354, %s355
      %p367 = scmp.eq.s32.totalorder %s41, 1
      %p368 = por %p366, %p367
      %p370 = scmp.ne.s32.totalorder %s355, %s369
      %p371 = scmp.eq.s32.totalorder %s41, 0
      %p372 = por %p370, %p371
      %s374 = sadd.s32 %s373, 1
      %p377 = scmp.eq.s32.totalorder %s35, 1
      %p378 = scmp.ne.s32.totalorder %s373, %s375
      %p379 = scmp.eq.s32.totalorder %s35, 0
      %p380 = por %p378, %p379
      %p381 = scmp.ne.s32.totalorder %s373, %s375
      %p382 = scmp.eq.s32.totalorder %s40, 1
      %p383 = por %p381, %p382
      %p384 = scmp.ne.s32.totalorder %s375, %s376
      %p385 = scmp.eq.s32.totalorder %s40, 0
      %p386 = por %p384, %p385
      %p387 = scmp.ne.s32.totalorder %s375, %s376
      %p388 = scmp.eq.s32.totalorder %s41, 1
      %p389 = por %p387, %p388
      %p391 = scmp.ne.s32.totalorder %s376, %s390
      %p392 = scmp.eq.s32.totalorder %s41, 0
      %p393 = por %p391, %p392
      %s394 = ssub.s32 %s35, %s42
      %p395 = scmp.eq.s32.totalorder %s394, 0
      %s397 = sadd.s32 %s396, 1
      %s398 = scalar_select %p395, %s396, %s397
      %p401 = pneg %p395
      %p402 = scmp.eq.s32.totalorder %s35, 1
      %p403 = por %p401, %p402
      %p404 = scmp.ne.s32.totalorder %s396, %s399
      %p405 = scmp.eq.s32.totalorder %s35, 0
      %p406 = por %p404, %p405
      %p407 = scmp.ne.s32.totalorder %s396, %s399
      %p408 = scmp.eq.s32.totalorder %s40, 1
      %p409 = por %p407, %p408
      %p410 = scmp.ne.s32.totalorder %s399, %s400
      %p411 = scmp.eq.s32.totalorder %s40, 0
      %p412 = por %p410, %p411
      %p413 = scmp.ne.s32.totalorder %s399, %s400
      %p414 = scmp.eq.s32.totalorder %s41, 1
      %p415 = por %p413, %p414
      %p417 = scmp.ne.s32.totalorder %s400, %s416
      %p418 = scmp.eq.s32.totalorder %s41, 0
      %p419 = por %p417, %p418
      %s420 = ssub.s32 %s35, %s42
      %p421 = scmp.eq.s32.totalorder %s420, 0
      %s423 = sadd.s32 %s422, 1
      %s424 = scalar_select %p421, %s422, %s423
      %p427 = pneg %p421
      %p428 = scmp.eq.s32.totalorder %s35, 1
      %p429 = por %p427, %p428
      %p430 = scmp.ne.s32.totalorder %s422, %s425
      %p431 = scmp.eq.s32.totalorder %s35, 0
      %p432 = por %p430, %p431
      %p433 = scmp.ne.s32.totalorder %s422, %s425
      %p434 = scmp.eq.s32.totalorder %s40, 1
      %p435 = por %p433, %p434
      %p436 = scmp.ne.s32.totalorder %s425, %s426
      %p437 = scmp.eq.s32.totalorder %s40, 0
      %p438 = por %p436, %p437
      %p439 = scmp.ne.s32.totalorder %s425, %s426
      %p440 = scmp.eq.s32.totalorder %s41, 1
      %p441 = por %p439, %p440
      %p443 = scmp.ne.s32.totalorder %s426, %s442
      %p444 = scmp.eq.s32.totalorder %s41, 0
      %p445 = por %p443, %p444
      %p446 = scmp.le.s32.totalorder 1, %s35
      %p447 = scmp.lt.s32.totalorder %s35, 3
      %p448 = pnand %p446, %p447
      %p449 = pneg %p448
      // Predicated region
      $region9: #{encoder_layer.1} parent=5 // pred_check
        _
      $region10: #{encoder_layer.1} parent=5 // pred_check_branch
        %451 = sbr.rel (%p448) target = $region12
      $region11: #{encoder_layer.1} parent=5 // pred_region
        %s452 = ssub.s32 %s35, 1
        // Predicated region
        $region13: #{encoder_layer.1} parent=11 // pred_check
          %p453 = pneg %p134
        $region14: #{encoder_layer.1} parent=11 // pred_check_branch
          %455 = sbr.rel (%p453) target = $region16
        $region15: #{encoder_layer.1} parent=11 // pred_region
          _
        $region16: #{encoder_layer.1} parent=11 // pred_fallthru
          _
        // Predicated region
        $region17: #{encoder_layer.1} parent=11 // pred_check
          %p456 = pneg %p155
        $region18: #{encoder_layer.1} parent=11 // pred_check_branch
          %458 = sbr.rel (%p456) target = $region20
        $region19: #{encoder_layer.1} parent=11 // pred_region
          _
        $region20: #{encoder_layer.1} parent=11 // pred_fallthru
          _
        // Predicated region
        $region21: #{encoder_layer.1} parent=11 // pred_check
          %p459 = pneg %p176
        $region22: #{encoder_layer.1} parent=11 // pred_check_branch
          %461 = sbr.rel (%p459) target = $region24
        $region23: #{encoder_layer.1} parent=11 // pred_region
          _
        $region24: #{encoder_layer.1} parent=11 // pred_fallthru
          _
        // Predicated region
        $region25: #{encoder_layer.1} parent=11 // pred_check
          %p462 = pneg %p197
        $region26: #{encoder_layer.1} parent=11 // pred_check_branch
          %464 = sbr.rel (%p462) target = $region28
        $region27: #{encoder_layer.1} parent=11 // pred_region
          %s466 = ssub.s32 512, 512
          %467 = vsyncadd [#allocation7], %s466
          %s468 = sshll.u32 [#allocation8], 4
          %s469 = int_to_ptr.vmem [resolvable:$true] %s468
          %474 = dma.hbm_to_vmem [thread:$0]  %s6, 512, %s469, [#allocation7], 128, 128, 8
        $region28: #{encoder_layer.1} parent=11 // pred_fallthru
          _
        // Predicated region
        $region29: #{encoder_layer.1} parent=11 // pred_check
          %p475 = pneg %p218
        $region30: #{encoder_layer.1} parent=11 // pred_check_branch
          %477 = sbr.rel (%p475) target = $region32
        $region31: #{encoder_layer.1} parent=11 // pred_region
          _
        $region32: #{encoder_layer.1} parent=11 // pred_fallthru
          _
        // Predicated region
        $region33: #{encoder_layer.1} parent=11 // pred_check
          %p478 = pneg %p239
        $region34: #{encoder_layer.1} parent=11 // pred_check_branch
          %480 = sbr.rel (%p478) target = $region36
        $region35: #{encoder_layer.1} parent=11 // pred_region
          _
        $region36: #{encoder_layer.1} parent=11 // pred_fallthru
          _
        // Predicated region
        $region37: #{encoder_layer.1} parent=11 // pred_check
          %p481 = pneg %p260
        $region38: #{encoder_layer.1} parent=11 // pred_check_branch
          %483 = sbr.rel (%p481) target = $region40
        $region39: #{encoder_layer.1} parent=11 // pred_region
          _
        $region40: #{encoder_layer.1} parent=11 // pred_fallthru
          _
        // Predicated region
        $region41: #{encoder_layer.1} parent=11 // pred_check
          %p484 = pneg %p281
        $region42: #{encoder_layer.1} parent=11 // pred_check_branch
          %486 = sbr.rel (%p484) target = $region44
        $region43: #{encoder_layer.1} parent=11 // pred_region
          %s488 = ssub.s32 512, 512
          %489 = vsyncadd [#allocation10], %s488
          %s490 = sshll.u32 [#allocation9], 4
          %s491 = int_to_ptr.vmem [resolvable:$true] %s490
          %496 = dma.hbm_to_vmem [thread:$0]  %s10, 512, %s491, [#allocation10], 128, 128, 8
        $region44: #{encoder_layer.1} parent=11 // pred_fallthru
          _
        // Predicated region
        $region45: #{encoder_layer.1} parent=11 // pred_check
          %p497 = pneg %p302
        $region46: #{encoder_layer.1} parent=11 // pred_check_branch
          %499 = sbr.rel (%p497) target = $region48
        $region47: #{encoder_layer.1} parent=11 // pred_region
          _
        $region48: #{encoder_layer.1} parent=11 // pred_fallthru
          _
        // Predicated region
        $region49: #{encoder_layer.1} parent=11 // pred_check
          %p500 = pneg %p323
        $region50: #{encoder_layer.1} parent=11 // pred_check_branch
          %502 = sbr.rel (%p500) target = $region52
        $region51: #{encoder_layer.1} parent=11 // pred_region
          _
        $region52: #{encoder_layer.1} parent=11 // pred_fallthru
          _
        // Predicated region
        $region53: #{encoder_layer.1} parent=11 // pred_check
          %p503 = pneg %p344
        $region54: #{encoder_layer.1} parent=11 // pred_check_branch
          %505 = sbr.rel (%p503) target = $region56
        $region55: #{encoder_layer.1} parent=11 // pred_region
          _
        $region56: #{encoder_layer.1} parent=11 // pred_fallthru
          _
        // Predicated region
        $region57: #{encoder_layer.1} parent=11 // pred_check
          %p506 = pneg %p365
        $region58: #{encoder_layer.1} parent=11 // pred_check_branch
          %508 = sbr.rel (%p506) target = $region60
        $region59: #{encoder_layer.1} parent=11 // pred_region
          %s510 = ssub.s32 16, 16
          %511 = vsyncadd [#allocation10], %s510
          %s513 = sshll.u32 [#allocation11], 4
          %s514 = int_to_ptr.vmem [resolvable:$true] %s513
          %516 = dma.hbm_to_vmem [thread:$0]  %s14, 16, %s514, [#allocation10]
        $region60: #{encoder_layer.1} parent=11 // pred_fallthru
          _
        // Predicated region
        $region61: #{encoder_layer.1} parent=11 // pred_check
          %p517 = pneg %p386
        $region62: #{encoder_layer.1} parent=11 // pred_check_branch
          %519 = sbr.rel (%p517) target = $region64
        $region63: #{encoder_layer.1} parent=11 // pred_region
          %s521 = ssub.s32 16, 16
          %522 = vsyncadd [#allocation13], %s521
          %s524 = sshll.u32 [#allocation12], 4
          %s525 = int_to_ptr.vmem [resolvable:$true] %s524
          %527 = dma.hbm_to_vmem [thread:$0]  %s15, 16, %s525, [#allocation13]
        $region64: #{encoder_layer.1} parent=11 // pred_fallthru
          _
      $region12: #{encoder_layer.1} parent=5 // pred_fallthru
        _
      %p528 = scmp.lt.s32.totalorder %s35, 2
      // Predicated region
      $region65: #{encoder_layer.1} parent=5 // pred_check
        %p529 = pneg %p528
      $region66: #{encoder_layer.1} parent=5 // pred_check_branch
        %531 = sbr.rel (%p529) target = $region68
      $region67: #{encoder_layer.1} parent=5 // pred_region
        // Predicated region
        $region69: #{encoder_layer.1} parent=67 // pred_check
          %p532 = pneg %p55
        $region70: #{encoder_layer.1} parent=67 // pred_check_branch
          %534 = sbr.rel (%p532) target = $region72
        $region71: #{encoder_layer.1} parent=67 // pred_region
          %s535 = sand.u32 %s45, 1
          %s536 = scalar_lea.sflag [#allocation4], %s535
          %s537 = sand.u32 %s45, 1
          %s538 = smul.addr %s537, 8
          %s539 = scalar_lea.vmem [#allocation3], %s538
          %s541 = ssub.s32 128, 128
          %542 = vsyncadd %s536, %s541
          %s543 = smul.addr %s35, 128
          %s544 = scalar_lea.hbm %s0, %s543
          %s546 = sshll.u32 %s539, 4
          %s547 = int_to_ptr.vmem [resolvable:$true] %s546
          %549 = dma.hbm_to_vmem [thread:$0]  %s544, 128, %s547, %s536
        $region72: #{encoder_layer.1} parent=67 // pred_fallthru
          _
        // Predicated region
        $region73: #{encoder_layer.1} parent=67 // pred_check
          %p550 = pneg %p81
        $region74: #{encoder_layer.1} parent=67 // pred_check_branch
          %552 = sbr.rel (%p550) target = $region76
        $region75: #{encoder_layer.1} parent=67 // pred_region
          %s553 = sand.u32 %s35, 1
          %s554 = scalar_lea.sflag [#allocation7], %s553
          %s555 = sand.u32 %s71, 1
          %s556 = smul.addr %s555, 8
          %s557 = scalar_lea.vmem [#allocation6], %s556
          %s559 = ssub.s32 128, 128
          %560 = vsyncadd %s554, %s559
          %s561 = smul.addr %s35, 128
          %s562 = scalar_lea.hbm %s1, %s561
          %s564 = sshll.u32 %s557, 4
          %s565 = int_to_ptr.vmem [resolvable:$true] %s564
          %567 = dma.hbm_to_vmem [thread:$0]  %s562, 128, %s565, %s554
        $region76: #{encoder_layer.1} parent=67 // pred_fallthru
          _
        // Predicated region
        $region77: #{encoder_layer.1} parent=67 // pred_check
          %p568 = pneg %p107
        $region78: #{encoder_layer.1} parent=67 // pred_check_branch
          %570 = sbr.rel (%p568) target = $region80
        $region79: #{encoder_layer.1} parent=67 // pred_region
          %p571 = scmp.lt.s32.totalorder %s35, 1
          %s572 = scalar_select %p571, %s35, 1
          %s573 = smul.addr %s572, 8
          %s574 = scalar_lea.vmem %s2, %s573
        $region80: #{encoder_layer.1} parent=67 // pred_fallthru
          _
      $region68: #{encoder_layer.1} parent=5 // pred_fallthru
        _
      %p575 = scmp.le.s32.totalorder 1, %s35
      %p576 = scmp.lt.s32.totalorder %s35, 3
      %p577 = pnand %p575, %p576
      %p578 = pneg %p577
      // Predicated region
      $region81: #{encoder_layer.1} parent=5 // pred_check
        _
      $region82: #{encoder_layer.1} parent=5 // pred_check_branch
        %580 = sbr.rel (%p577) target = $region84
      $region83: #{encoder_layer.1} parent=5 // pred_region
        %s581 = ssub.s32 %s35, 1
        %s582 = sand.u32 %s48, 1
        %s583 = scalar_lea.sflag [#allocation4], %s582
        %s584 = sand.u32 %s48, 1
        %s585 = smul.addr %s584, 8
        %s586 = scalar_lea.vmem [#allocation3], %s585
        // Predicated region
        $region85: #{encoder_layer.1} parent=83 // pred_check
          %p587 = pneg %p61
        $region86: #{encoder_layer.1} parent=83 // pred_check_branch
          %589 = sbr.rel (%p587) target = $region88
        $region87: #{encoder_layer.1} parent=83 // pred_region
          %590 = dma.done %s583, 128
        $region88: #{encoder_layer.1} parent=83 // pred_fallthru
          _
        %s591 = sand.u32 %s40, 1
        %s592 = scalar_lea.sflag [#allocation7], %s591
        %s593 = sand.u32 %s74, 1
        %s594 = smul.addr %s593, 8
        %s595 = scalar_lea.vmem [#allocation6], %s594
        // Predicated region
        $region89: #{encoder_layer.1} parent=83 // pred_check
          %p596 = pneg %p87
        $region90: #{encoder_layer.1} parent=83 // pred_check_branch
          %598 = sbr.rel (%p596) target = $region92
        $region91: #{encoder_layer.1} parent=83 // pred_region
          %599 = dma.done %s592, 128
        $region92: #{encoder_layer.1} parent=83 // pred_fallthru
          _
        // Predicated region
        $region93: #{encoder_layer.1} parent=83 // pred_check
          %p600 = pneg %p197
        $region94: #{encoder_layer.1} parent=83 // pred_check_branch
          %602 = sbr.rel (%p600) target = $region96
        $region95: #{encoder_layer.1} parent=83 // pred_region
          %603 = dma.done [#allocation7], 512
        $region96: #{encoder_layer.1} parent=83 // pred_fallthru
          _
        // Predicated region
        $region97: #{encoder_layer.1} parent=83 // pred_check
          %p604 = pneg %p281
        $region98: #{encoder_layer.1} parent=83 // pred_check_branch
          %606 = sbr.rel (%p604) target = $region100
        $region99: #{encoder_layer.1} parent=83 // pred_region
          %607 = dma.done [#allocation10], 512
        $region100: #{encoder_layer.1} parent=83 // pred_fallthru
          _
        // Predicated region
        $region101: #{encoder_layer.1} parent=83 // pred_check
          %p608 = pneg %p365
        $region102: #{encoder_layer.1} parent=83 // pred_check_branch
          %610 = sbr.rel (%p608) target = $region104
        $region103: #{encoder_layer.1} parent=83 // pred_region
          %611 = dma.done [#allocation10], 16
        $region104: #{encoder_layer.1} parent=83 // pred_fallthru
          _
        // Predicated region
        $region105: #{encoder_layer.1} parent=83 // pred_check
          %p612 = pneg %p386
        $region106: #{encoder_layer.1} parent=83 // pred_check_branch
          %614 = sbr.rel (%p612) target = $region108
        $region107: #{encoder_layer.1} parent=83 // pred_region
          %615 = dma.done [#allocation13], 16
        $region108: #{encoder_layer.1} parent=83 // pred_fallthru
          _
        %s616 = sand.u32 %s48, 1
        %s617 = scalar_lea.sflag [#allocation4], %s616
        %s618 = sand.u32 %s48, 1
        %s619 = smul.addr %s618, 8
        %s620 = scalar_lea.vmem [#allocation3], %s619
        %p621 = pneg %p61
        %p622 = pneg %p58
        %s623 = sand.u32 %s40, 1
        %s624 = scalar_lea.sflag [#allocation7], %s623
        %s625 = sand.u32 %s74, 1
        %s626 = smul.addr %s625, 8
        %s627 = scalar_lea.vmem [#allocation6], %s626
        %p628 = pneg %p87
        %p629 = pneg %p84
        %p630 = scmp.lt.s32.totalorder %s40, 1
        %s631 = scalar_select %p630, %s40, 1
        %s632 = smul.addr %s631, 8
        %s633 = scalar_lea.vmem %s2, %s632
        %p634 = pneg %p113
        %p635 = pneg %p110
        %p636 = pneg %p134
        %p637 = pneg %p131
        %p638 = pneg %p155
        %p639 = pneg %p152
        %p640 = pneg %p176
        %p641 = pneg %p173
        %p642 = pneg %p197
        %p643 = pneg %p194
        %p644 = pneg %p218
        %p645 = pneg %p215
        %p646 = pneg %p239
        %p647 = pneg %p236
        %p648 = pneg %p260
        %p649 = pneg %p257
        %p650 = pneg %p281
        %p651 = pneg %p278
        %p652 = pneg %p302
        %p653 = pneg %p299
        %p654 = pneg %p323
        %p655 = pneg %p320
        %p656 = pneg %p344
        %p657 = pneg %p341
        %p658 = pneg %p365
        %p659 = pneg %p362
        %p660 = pneg %p386
        %p661 = pneg %p383
        %p662 = pneg %p412
        %p663 = pneg %p409
        %s664 = sand.u32 %s399, 1
        %s665 = scalar_lea.sflag [#allocation5], %s664
        %s666 = sand.u32 %s399, 1
        %s667 = smul.addr %s666, 8
        %s668 = scalar_lea.vmem [#allocation14], %s667
        %p669 = pneg %p438
        %p670 = pneg %p435
        %s671 = smul.u32 4, %s40
        %p672 = scmp.lt.s32.totalorder %s671, 7
        %s673 = scalar_select %p672, %s671, 7
        %s674 = smul.addr %s673, 2
        %s675 = scalar_lea.vmem %s17, %s674
        %p676 = scmp.lt.s32.totalorder %s40, 1
        %s677 = scalar_select %p676, %s40, 1
        %s678 = smul.addr %s677, 8
        %s679 = scalar_lea.vmem %s2, %s678
        %s680 = smul.u32 4, %s40
        %p681 = scmp.lt.s32.totalorder %s680, 7
        %s682 = scalar_select %p681, %s680, 7
        %s683 = smul.addr %s682, 2
        %s684 = scalar_lea.vmem %s17, %s683
        %s685 = smul.u32 4, %s40
        %v686 = vld [vmem:[%s586] sm:$0xff]
        %v687 = vld [vmem:[%s595] sm:$0xff]
        %v688 = vld [vmem:[%s679] sm:$0xff]
        %v689 = vld [vmem:[%s3] sm:$0xff]
        %v690 = vld [vmem:[%s3 + $0x8] sm:$0xff]
        %v691 = vld [vmem:[%s3 + $0x10] sm:$0xff]
        %v692 = vld [vmem:[%s3 + $0x18] sm:$0xff]
        %vm693 = vcmask 261120
        %v695 = vsel %vm693, %v686, 0
        %697 = vmatprep.subr.mxu0 0.0
        %698 = vmatpush1.msra.mxu0 %v689
        %699 = vmatprep.subr.mxu0 0.0
        %700 = vmatpush1.msra.mxu0 %v690
        %701 = vmatprep.subr.mxu0 0.0
        %702 = vmatpush1.msra.mxu0 %v691
        %703 = vmatprep.subr.mxu0 0.0
        %704 = vmatpush1.msra.mxu0 %v692
        %705 = vmatprep.subr.mxu0 0.0
        %706 = vmatpush1.msra.mxu0 0.0
        %707 = vmatprep.subr.mxu0 0.0
        %708 = vmatpush1.msra.mxu0 0.0
        %709 = vmatprep.subr.mxu0 0.0
        %710 = vmatpush1.msra.mxu0 0.0
        %711 = vmatprep.subr.mxu0 0.0
        %712 = vmatpush1.msra.mxu0 0.0
        %713 = vmatprep.subr.mxu0 0.0
        %714 = vmatpush1.msra.mxu0 0.0
        %715 = vmatprep.subr.mxu0 0.0
        %716 = vmatpush1.msra.mxu0 0.0
        %717 = vmatprep.subr.mxu0 0.0
        %718 = vmatpush1.msra.mxu0 0.0
        %719 = vmatprep.subr.mxu0 0.0
        %720 = vmatpush1.msra.mxu0 0.0
        %721 = vmatprep.subr.mxu0 0.0
        %722 = vmatpush1.msra.mxu0 0.0
        %723 = vmatprep.subr.mxu0 0.0
        %724 = vmatpush1.msra.mxu0 0.0
        %725 = vmatprep.subr.mxu0 0.0
        %726 = vmatpush1.msra.mxu0 0.0
        %727 = vmatprep.subr.mxu0 0.0
        %728 = vmatpush1.msra.mxu0 0.0
        %729 = vmatprep.subr.mxu0 0.0
        %730 = vmatpush1.msra.mxu0 0.0
        %731 = vmatprep.subr.mxu0 0.0
        %732 = vmatpush1.msra.mxu0 0.0
        %733 = vmatprep.subr.mxu0 0.0
        %734 = vmatpush1.msra.mxu0 0.0
        %735 = vmatprep.subr.mxu0 0.0
        %736 = vmatpush1.msra.mxu0 0.0
        %737 = vmatprep.subr.mxu0 0.0
        %738 = vmatpush1.msra.mxu0 0.0
        %739 = vmatprep.subr.mxu0 0.0
        %740 = vmatpush1.msra.mxu0 0.0
        %741 = vmatprep.subr.mxu0 0.0
        %742 = vmatpush1.msra.mxu0 0.0
        %743 = vmatprep.subr.mxu0 0.0
        %744 = vmatpush1.msra.mxu0 0.0
        %745 = vmatprep.subr.mxu0 0.0
        %746 = vmatpush1.msra.mxu0 0.0
        %747 = vmatprep.subr.mxu0 0.0
        %748 = vmatpush1.msra.mxu0 0.0
        %749 = vmatprep.subr.mxu0 0.0
        %750 = vmatpush1.msra.mxu0 0.0
        %751 = vmatprep.subr.mxu0 0.0
        %752 = vmatpush1.msra.mxu0 0.0
        %753 = vmatprep.subr.mxu0 0.0
        %754 = vmatpush1.msra.mxu0 0.0
        %755 = vmatprep.subr.mxu0 0.0
        %756 = vmatpush1.msra.mxu0 0.0
        %757 = vmatprep.subr.mxu0 0.0
        %758 = vmatpush1.msra.mxu0 0.0
        %759 = vmatprep.subr.mxu0 0.0
        %760 = vmatpush1.msra.mxu0 0.0
        %761 = vmatprep.mubr.f32.mxu0 0.0
        %762 = vmatmul.mubr.f32.gmra.mrb[0].mxu0 %v695
        %v763 = vpop.f32.mrb[0].mxu0
        %v764 = vadd.f32 0.0, %v763
        %v765 = vpop.f32.mrb[0].mxu0
        %766 = vdwg.mxu0
        %v767 = vld [vmem:[%s4] sm:$0xff]
        %v768 = vld [vmem:[%s4 + $0x8] sm:$0xff]
        %v769 = vld [vmem:[%s4 + $0x10] sm:$0xff]
        %v770 = vld [vmem:[%s4 + $0x18] sm:$0xff]
        %v772 = vsel %vm693, %v687, 0
        %774 = vmatprep.subr.mxu0 0.0
        %775 = vmatpush1.msra.mxu0 %v767
        %776 = vmatprep.subr.mxu0 0.0
        %777 = vmatpush1.msra.mxu0 %v768
        %778 = vmatprep.subr.mxu0 0.0
        %779 = vmatpush1.msra.mxu0 %v769
        %780 = vmatprep.subr.mxu0 0.0
        %781 = vmatpush1.msra.mxu0 %v770
        %782 = vmatprep.subr.mxu0 0.0
        %783 = vmatpush1.msra.mxu0 0.0
        %784 = vmatprep.subr.mxu0 0.0
        %785 = vmatpush1.msra.mxu0 0.0
        %786 = vmatprep.subr.mxu0 0.0
        %787 = vmatpush1.msra.mxu0 0.0
        %788 = vmatprep.subr.mxu0 0.0
        %789 = vmatpush1.msra.mxu0 0.0
        %790 = vmatprep.subr.mxu0 0.0
        %791 = vmatpush1.msra.mxu0 0.0
        %792 = vmatprep.subr.mxu0 0.0
        %793 = vmatpush1.msra.mxu0 0.0
        %794 = vmatprep.subr.mxu0 0.0
        %795 = vmatpush1.msra.mxu0 0.0
        %796 = vmatprep.subr.mxu0 0.0
        %797 = vmatpush1.msra.mxu0 0.0
        %798 = vmatprep.subr.mxu0 0.0
        %799 = vmatpush1.msra.mxu0 0.0
        %800 = vmatprep.subr.mxu0 0.0
        %801 = vmatpush1.msra.mxu0 0.0
        %802 = vmatprep.subr.mxu0 0.0
        %803 = vmatpush1.msra.mxu0 0.0
        %804 = vmatprep.subr.mxu0 0.0
        %805 = vmatpush1.msra.mxu0 0.0
        %806 = vmatprep.subr.mxu0 0.0
        %807 = vmatpush1.msra.mxu0 0.0
        %808 = vmatprep.subr.mxu0 0.0
        %809 = vmatpush1.msra.mxu0 0.0
        %810 = vmatprep.subr.mxu0 0.0
        %811 = vmatpush1.msra.mxu0 0.0
        %812 = vmatprep.subr.mxu0 0.0
        %813 = vmatpush1.msra.mxu0 0.0
        %814 = vmatprep.subr.mxu0 0.0
        %815 = vmatpush1.msra.mxu0 0.0
        %816 = vmatprep.subr.mxu0 0.0
        %817 = vmatpush1.msra.mxu0 0.0
        %818 = vmatprep.subr.mxu0 0.0
        %819 = vmatpush1.msra.mxu0 0.0
        %820 = vmatprep.subr.mxu0 0.0
        %821 = vmatpush1.msra.mxu0 0.0
        %822 = vmatprep.subr.mxu0 0.0
        %823 = vmatpush1.msra.mxu0 0.0
        %824 = vmatprep.subr.mxu0 0.0
        %825 = vmatpush1.msra.mxu0 0.0
        %826 = vmatprep.subr.mxu0 0.0
        %827 = vmatpush1.msra.mxu0 0.0
        %828 = vmatprep.subr.mxu0 0.0
        %829 = vmatpush1.msra.mxu0 0.0
        %830 = vmatprep.subr.mxu0 0.0
        %831 = vmatpush1.msra.mxu0 0.0
        %832 = vmatprep.subr.mxu0 0.0
        %833 = vmatpush1.msra.mxu0 0.0
        %834 = vmatprep.subr.mxu0 0.0
        %835 = vmatpush1.msra.mxu0 0.0
        %836 = vmatprep.subr.mxu0 0.0
        %837 = vmatpush1.msra.mxu0 0.0
        %838 = vmatprep.mubr.f32.mxu0 0.0
        %839 = vmatmul.mubr.f32.gmra.mrb[0].mxu0 %v772
        %v840 = vpop.f32.mrb[0].mxu0
        %v841 = vadd.f32 0.0, %v840
        %v842 = vpop.f32.mrb[0].mxu0
        %843 = vdwg.mxu0
        %v844 = vld [vmem:[%s5] sm:$0xff]
        %v845 = vld [vmem:[%s5 + $0x8] sm:$0xff]
        %v846 = vld [vmem:[%s5 + $0x10] sm:$0xff]
        %v847 = vld [vmem:[%s5 + $0x18] sm:$0xff]
        %v849 = vsel %vm693, %v688, 0
        %851 = vmatprep.subr.mxu0 0.0
        %852 = vmatpush1.msra.mxu0 %v844
        %853 = vmatprep.subr.mxu0 0.0
        %854 = vmatpush1.msra.mxu0 %v845
        %855 = vmatprep.subr.mxu0 0.0
        %856 = vmatpush1.msra.mxu0 %v846
        %857 = vmatprep.subr.mxu0 0.0
        %858 = vmatpush1.msra.mxu0 %v847
        %859 = vmatprep.subr.mxu0 0.0
        %860 = vmatpush1.msra.mxu0 0.0
        %861 = vmatprep.subr.mxu0 0.0
        %862 = vmatpush1.msra.mxu0 0.0
        %863 = vmatprep.subr.mxu0 0.0
        %864 = vmatpush1.msra.mxu0 0.0
        %865 = vmatprep.subr.mxu0 0.0
        %866 = vmatpush1.msra.mxu0 0.0
        %867 = vmatprep.subr.mxu0 0.0
        %868 = vmatpush1.msra.mxu0 0.0
        %869 = vmatprep.subr.mxu0 0.0
        %870 = vmatpush1.msra.mxu0 0.0
        %871 = vmatprep.subr.mxu0 0.0
        %872 = vmatpush1.msra.mxu0 0.0
        %873 = vmatprep.subr.mxu0 0.0
        %874 = vmatpush1.msra.mxu0 0.0
        %875 = vmatprep.subr.mxu0 0.0
        %876 = vmatpush1.msra.mxu0 0.0
        %877 = vmatprep.subr.mxu0 0.0
        %878 = vmatpush1.msra.mxu0 0.0
        %879 = vmatprep.subr.mxu0 0.0
        %880 = vmatpush1.msra.mxu0 0.0
        %881 = vmatprep.subr.mxu0 0.0
        %882 = vmatpush1.msra.mxu0 0.0
        %883 = vmatprep.subr.mxu0 0.0
        %884 = vmatpush1.msra.mxu0 0.0
        %885 = vmatprep.subr.mxu0 0.0
        %886 = vmatpush1.msra.mxu0 0.0
        %887 = vmatprep.subr.mxu0 0.0
        %888 = vmatpush1.msra.mxu0 0.0
        %889 = vmatprep.subr.mxu0 0.0
        %890 = vmatpush1.msra.mxu0 0.0
        %891 = vmatprep.subr.mxu0 0.0
        %892 = vmatpush1.msra.mxu0 0.0
        %893 = vmatprep.subr.mxu0 0.0
        %894 = vmatpush1.msra.mxu0 0.0
        %895 = vmatprep.subr.mxu0 0.0
        %896 = vmatpush1.msra.mxu0 0.0
        %897 = vmatprep.subr.mxu0 0.0
        %898 = vmatpush1.msra.mxu0 0.0
        %899 = vmatprep.subr.mxu0 0.0
        %900 = vmatpush1.msra.mxu0 0.0
        %901 = vmatprep.subr.mxu0 0.0
        %902 = vmatpush1.msra.mxu0 0.0
        %903 = vmatprep.subr.mxu0 0.0
        %904 = vmatpush1.msra.mxu0 0.0
        %905 = vmatprep.subr.mxu0 0.0
        %906 = vmatpush1.msra.mxu0 0.0
        %907 = vmatprep.subr.mxu0 0.0
        %908 = vmatpush1.msra.mxu0 0.0
        %909 = vmatprep.subr.mxu0 0.0
        %910 = vmatpush1.msra.mxu0 0.0
        %911 = vmatprep.subr.mxu0 0.0
        %912 = vmatpush1.msra.mxu0 0.0
        %913 = vmatprep.subr.mxu0 0.0
        %914 = vmatpush1.msra.mxu0 0.0
        %915 = vmatprep.mubr.f32.mxu0 0.0
        %916 = vmatmul.mubr.f32.gmra.mrb[0].mxu0 %v849
        %v917 = vpop.f32.mrb[0].mxu0
        %v918 = vadd.f32 0.0, %v917
        %v919 = vpop.f32.mrb[0].mxu0
        %920 = vdwg.mxu0
        %v922 = vsel %vm693, %v764, 0
        %v925 = vsel %vm693, %v841, 0
        %927 = vmatprep.subr.mxu0 0.0
        %928 = vmatpush1.xpose.msra.mxu0 %v925
        %929 = vmatprep.subr.mxu0 0.0
        %930 = vmatpush1.xpose.msra.mxu0 0.0
        %931 = vmatprep.subr.mxu0 0.0
        %932 = vmatpush1.xpose.msra.mxu0 0.0
        %933 = vmatprep.subr.mxu0 0.0
        %934 = vmatpush1.xpose.msra.mxu0 0.0
        %935 = vmatprep.subr.mxu0 0.0
        %936 = vmatpush1.xpose.msra.mxu0 0.0
        %937 = vmatprep.subr.mxu0 0.0
        %938 = vmatpush1.xpose.msra.mxu0 0.0
        %939 = vmatprep.subr.mxu0 0.0
        %940 = vmatpush1.xpose.msra.mxu0 0.0
        %941 = vmatprep.subr.mxu0 0.0
        %942 = vmatpush1.xpose.msra.mxu0 0.0
        %943 = vmatprep.subr.mxu0 0.0
        %944 = vmatpush1.xpose.msra.mxu0 0.0
        %945 = vmatprep.subr.mxu0 0.0
        %946 = vmatpush1.xpose.msra.mxu0 0.0
        %947 = vmatprep.subr.mxu0 0.0
        %948 = vmatpush1.xpose.msra.mxu0 0.0
        %949 = vmatprep.subr.mxu0 0.0
        %950 = vmatpush1.xpose.msra.mxu0 0.0
        %951 = vmatprep.subr.mxu0 0.0
        %952 = vmatpush1.xpose.msra.mxu0 0.0
        %953 = vmatprep.subr.mxu0 0.0
        %954 = vmatpush1.xpose.msra.mxu0 0.0
        %955 = vmatprep.subr.mxu0 0.0
        %956 = vmatpush1.xpose.msra.mxu0 0.0
        %957 = vmatprep.subr.mxu0 0.0
        %958 = vmatpush1.xpose.msra.mxu0 0.0
        %959 = vmatprep.subr.mxu0 0.0
        %960 = vmatpush1.xpose.msra.mxu0 0.0
        %961 = vmatprep.subr.mxu0 0.0
        %962 = vmatpush1.xpose.msra.mxu0 0.0
        %963 = vmatprep.subr.mxu0 0.0
        %964 = vmatpush1.xpose.msra.mxu0 0.0
        %965 = vmatprep.subr.mxu0 0.0
        %966 = vmatpush1.xpose.msra.mxu0 0.0
        %967 = vmatprep.subr.mxu0 0.0
        %968 = vmatpush1.xpose.msra.mxu0 0.0
        %969 = vmatprep.subr.mxu0 0.0
        %970 = vmatpush1.xpose.msra.mxu0 0.0
        %971 = vmatprep.subr.mxu0 0.0
        %972 = vmatpush1.xpose.msra.mxu0 0.0
        %973 = vmatprep.subr.mxu0 0.0
        %974 = vmatpush1.xpose.msra.mxu0 0.0
        %975 = vmatprep.subr.mxu0 0.0
        %976 = vmatpush1.xpose.msra.mxu0 0.0
        %977 = vmatprep.subr.mxu0 0.0
        %978 = vmatpush1.xpose.msra.mxu0 0.0
        %979 = vmatprep.subr.mxu0 0.0
        %980 = vmatpush1.xpose.msra.mxu0 0.0
        %981 = vmatprep.subr.mxu0 0.0
        %982 = vmatpush1.xpose.msra.mxu0 0.0
        %983 = vmatprep.subr.mxu0 0.0
        %984 = vmatpush1.xpose.msra.mxu0 0.0
        %985 = vmatprep.subr.mxu0 0.0
        %986 = vmatpush1.xpose.msra.mxu0 0.0
        %987 = vmatprep.subr.mxu0 0.0
        %988 = vmatpush1.xpose.msra.mxu0 0.0
        %989 = vmatprep.subr.mxu0 0.0
        %990 = vmatpush1.xpose.msra.mxu0 0.0
        %991 = vmatprep.mubr.f32.mxu0 0.0
        %992 = vmatmul.mubr.f32.gmra.mrb[0].mxu0 %v922
        %v993 = vpop.f32.mrb[0].mxu0
        %v994 = vadd.f32 0.0, %v993
        %v995 = vpop.f32.mrb[0].mxu0
        %996 = vdwg.mxu0
        %v997 = vmul.f32 %v994, 0.35355338
        %vm998 = vcmask 9216
        %v999 = vsel %vm998, %v997, -inf
        %1000 = vmax.xlane.f32.xlu0 %v999
        %v1001 = vpop.xlane.xlu0 %1000
        %v1002 = vsub.f32 %v997, %v1001
        %v1003 = vmul.f32 %v1002, 1.442695
        %v1004 = vpow.pop %v1003
        %v1005 = vsel %vm998, %v1004, 0.0
        %1006 = vadd.xlane.f32.xlu0 %v1005
        %v1007 = vpop.xlane.xlu0 %1006
        %v1008 = vrcp.pop %v1007
        %v1009 = vmul.f32 %v1004, %v1008
        %1010 = vst.msk [vmem:[%s684] sm:$0x3] %vm998, %v1009
        %vm1011 = vcmask 15360
        %v1013 = vsel %vm1011, %v1009, 0
        %vm1015 = vcmask 1041408
        %v1017 = vsel %vm1015, %v918, 0
        %1019 = vmatprep.subr.mxu0 0.0
        %1020 = vmatpush1.msra.mxu0 %v1017
        %1021 = vmatprep.subr.mxu0 0.0
        %1022 = vmatpush1.msra.mxu0 0.0
        %1023 = vmatprep.subr.mxu0 0.0
        %1024 = vmatpush1.msra.mxu0 0.0
        %1025 = vmatprep.subr.mxu0 0.0
        %1026 = vmatpush1.msra.mxu0 0.0
        %1027 = vmatprep.subr.mxu0 0.0
        %1028 = vmatpush1.msra.mxu0 0.0
        %1029 = vmatprep.subr.mxu0 0.0
        %1030 = vmatpush1.msra.mxu0 0.0
        %1031 = vmatprep.subr.mxu0 0.0
        %1032 = vmatpush1.msra.mxu0 0.0
        %1033 = vmatprep.subr.mxu0 0.0
        %1034 = vmatpush1.msra.mxu0 0.0
        %1035 = vmatprep.subr.mxu0 0.0
        %1036 = vmatpush1.msra.mxu0 0.0
        %1037 = vmatprep.subr.mxu0 0.0
        %1038 = vmatpush1.msra.mxu0 0.0
        %1039 = vmatprep.subr.mxu0 0.0
        %1040 = vmatpush1.msra.mxu0 0.0
        %1041 = vmatprep.subr.mxu0 0.0
        %1042 = vmatpush1.msra.mxu0 0.0
        %1043 = vmatprep.subr.mxu0 0.0
        %1044 = vmatpush1.msra.mxu0 0.0
        %1045 = vmatprep.subr.mxu0 0.0
        %1046 = vmatpush1.msra.mxu0 0.0
        %1047 = vmatprep.subr.mxu0 0.0
        %1048 = vmatpush1.msra.mxu0 0.0
        %1049 = vmatprep.subr.mxu0 0.0
        %1050 = vmatpush1.msra.mxu0 0.0
        %1051 = vmatprep.subr.mxu0 0.0
        %1052 = vmatpush1.msra.mxu0 0.0
        %1053 = vmatprep.subr.mxu0 0.0
        %1054 = vmatpush1.msra.mxu0 0.0
        %1055 = vmatprep.subr.mxu0 0.0
        %1056 = vmatpush1.msra.mxu0 0.0
        %1057 = vmatprep.subr.mxu0 0.0
        %1058 = vmatpush1.msra.mxu0 0.0
        %1059 = vmatprep.subr.mxu0 0.0
        %1060 = vmatpush1.msra.mxu0 0.0
        %1061 = vmatprep.subr.mxu0 0.0
        %1062 = vmatpush1.msra.mxu0 0.0
        %1063 = vmatprep.subr.mxu0 0.0
        %1064 = vmatpush1.msra.mxu0 0.0
        %1065 = vmatprep.subr.mxu0 0.0
        %1066 = vmatpush1.msra.mxu0 0.0
        %1067 = vmatprep.subr.mxu0 0.0
        %1068 = vmatpush1.msra.mxu0 0.0
        %1069 = vmatprep.subr.mxu0 0.0
        %1070 = vmatpush1.msra.mxu0 0.0
        %1071 = vmatprep.subr.mxu0 0.0
        %1072 = vmatpush1.msra.mxu0 0.0
        %1073 = vmatprep.subr.mxu0 0.0
        %1074 = vmatpush1.msra.mxu0 0.0
        %1075 = vmatprep.subr.mxu0 0.0
        %1076 = vmatpush1.msra.mxu0 0.0
        %1077 = vmatprep.subr.mxu0 0.0
        %1078 = vmatpush1.msra.mxu0 0.0
        %1079 = vmatprep.subr.mxu0 0.0
        %1080 = vmatpush1.msra.mxu0 0.0
        %1081 = vmatprep.subr.mxu0 0.0
        %1082 = vmatpush1.msra.mxu0 0.0
        %1083 = vmatprep.mubr.f32.mxu0 0.0
        %1084 = vmatmul.mubr.f32.gmra.mrb[0].mxu0 %v1013
        %v1085 = vpop.f32.mrb[0].mxu0
        %v1086 = vadd.f32 0.0, %v1085
        %v1087 = vpop.f32.mrb[0].mxu0
        %1088 = vdwg.mxu0
        %vm1089 = vcmask 254976
        %1090 = vst.msk [vmem:[#allocation2] sm:$0x3] %vm1089, %v1086
        %v1091 = vrot.slane %v764, 2
        %v1092 = vrot.slane %v841, 2
        %v1093 = vsel %vm693, %v1091, 0
        %v1095 = vsel %vm693, %v1092, 0
        %1097 = vmatprep.subr.mxu0 0.0
        %1098 = vmatpush1.xpose.msra.mxu0 %v1095
        %1099 = vmatprep.subr.mxu0 0.0
        %1100 = vmatpush1.xpose.msra.mxu0 0.0
        %1101 = vmatprep.subr.mxu0 0.0
        %1102 = vmatpush1.xpose.msra.mxu0 0.0
        %1103 = vmatprep.subr.mxu0 0.0
        %1104 = vmatpush1.xpose.msra.mxu0 0.0
        %1105 = vmatprep.subr.mxu0 0.0
        %1106 = vmatpush1.xpose.msra.mxu0 0.0
        %1107 = vmatprep.subr.mxu0 0.0
        %1108 = vmatpush1.xpose.msra.mxu0 0.0
        %1109 = vmatprep.subr.mxu0 0.0
        %1110 = vmatpush1.xpose.msra.mxu0 0.0
        %1111 = vmatprep.subr.mxu0 0.0
        %1112 = vmatpush1.xpose.msra.mxu0 0.0
        %1113 = vmatprep.subr.mxu0 0.0
        %1114 = vmatpush1.xpose.msra.mxu0 0.0
        %1115 = vmatprep.subr.mxu0 0.0
        %1116 = vmatpush1.xpose.msra.mxu0 0.0
        %1117 = vmatprep.subr.mxu0 0.0
        %1118 = vmatpush1.xpose.msra.mxu0 0.0
        %1119 = vmatprep.subr.mxu0 0.0
        %1120 = vmatpush1.xpose.msra.mxu0 0.0
        %1121 = vmatprep.subr.mxu0 0.0
        %1122 = vmatpush1.xpose.msra.mxu0 0.0
        %1123 = vmatprep.subr.mxu0 0.0
        %1124 = vmatpush1.xpose.msra.mxu0 0.0
        %1125 = vmatprep.subr.mxu0 0.0
        %1126 = vmatpush1.xpose.msra.mxu0 0.0
        %1127 = vmatprep.subr.mxu0 0.0
        %1128 = vmatpush1.xpose.msra.mxu0 0.0
        %1129 = vmatprep.subr.mxu0 0.0
        %1130 = vmatpush1.xpose.msra.mxu0 0.0
        %1131 = vmatprep.subr.mxu0 0.0
        %1132 = vmatpush1.xpose.msra.mxu0 0.0
        %1133 = vmatprep.subr.mxu0 0.0
        %1134 = vmatpush1.xpose.msra.mxu0 0.0
        %1135 = vmatprep.subr.mxu0 0.0
        %1136 = vmatpush1.xpose.msra.mxu0 0.0
        %1137 = vmatprep.subr.mxu0 0.0
        %1138 = vmatpush1.xpose.msra.mxu0 0.0
        %1139 = vmatprep.subr.mxu0 0.0
        %1140 = vmatpush1.xpose.msra.mxu0 0.0
        %1141 = vmatprep.subr.mxu0 0.0
        %1142 = vmatpush1.xpose.msra.mxu0 0.0
        %1143 = vmatprep.subr.mxu0 0.0
        %1144 = vmatpush1.xpose.msra.mxu0 0.0
        %1145 = vmatprep.subr.mxu0 0.0
        %1146 = vmatpush1.xpose.msra.mxu0 0.0
        %1147 = vmatprep.subr.mxu0 0.0
        %1148 = vmatpush1.xpose.msra.mxu0 0.0
        %1149 = vmatprep.subr.mxu0 0.0
        %1150 = vmatpush1.xpose.msra.mxu0 0.0
        %1151 = vmatprep.subr.mxu0 0.0
        %1152 = vmatpush1.xpose.msra.mxu0 0.0
        %1153 = vmatprep.subr.mxu0 0.0
        %1154 = vmatpush1.xpose.msra.mxu0 0.0
        %1155 = vmatprep.subr.mxu0 0.0
        %1156 = vmatpush1.xpose.msra.mxu0 0.0
        %1157 = vmatprep.subr.mxu0 0.0
        %1158 = vmatpush1.xpose.msra.mxu0 0.0
        %1159 = vmatprep.subr.mxu0 0.0
        %1160 = vmatpush1.xpose.msra.mxu0 0.0
        %1161 = vmatprep.mubr.f32.mxu0 0.0
        %1162 = vmatmul.mubr.f32.gmra.mrb[0].mxu0 %v1093
        %v1163 = vpop.f32.mrb[0].mxu0
        %v1164 = vadd.f32 0.0, %v1163
        %v1165 = vpop.f32.mrb[0].mxu0
        %1166 = vdwg.mxu0
        %v1167 = vmul.f32 %v1164, 0.35355338
        %v1168 = vsel %vm998, %v1167, -inf
        %1169 = vmax.xlane.f32.xlu0 %v1168
        %v1170 = vpop.xlane.xlu0 %1169
        %v1171 = vsub.f32 %v1167, %v1170
        %v1172 = vmul.f32 %v1171, 1.442695
        %v1173 = vpow.pop %v1172
        %v1174 = vsel %vm998, %v1173, 0.0
        %1175 = vadd.xlane.f32.xlu0 %v1174
        %v1176 = vpop.xlane.xlu0 %1175
        %v1177 = vrcp.pop %v1176
        %v1178 = vmul.f32 %v1173, %v1177
        %s1179 = scalar_lea.vmem %s684, 2
        %1180 = vst.msk [vmem:[%s1179] sm:$0x3] %vm998, %v1178
        %v1181 = vrot.slane %v918, 2
        %v1183 = vsel %vm1011, %v1178, 0
        %v1185 = vsel %vm1015, %v1181, 0
        %1187 = vmatprep.subr.mxu0 0.0
        %1188 = vmatpush1.msra.mxu0 %v1185
        %1189 = vmatprep.subr.mxu0 0.0
        %1190 = vmatpush1.msra.mxu0 0.0
        %1191 = vmatprep.subr.mxu0 0.0
        %1192 = vmatpush1.msra.mxu0 0.0
        %1193 = vmatprep.subr.mxu0 0.0
        %1194 = vmatpush1.msra.mxu0 0.0
        %1195 = vmatprep.subr.mxu0 0.0
        %1196 = vmatpush1.msra.mxu0 0.0
        %1197 = vmatprep.subr.mxu0 0.0
        %1198 = vmatpush1.msra.mxu0 0.0
        %1199 = vmatprep.subr.mxu0 0.0
        %1200 = vmatpush1.msra.mxu0 0.0
        %1201 = vmatprep.subr.mxu0 0.0
        %1202 = vmatpush1.msra.mxu0 0.0
        %1203 = vmatprep.subr.mxu0 0.0
        %1204 = vmatpush1.msra.mxu0 0.0
        %1205 = vmatprep.subr.mxu0 0.0
        %1206 = vmatpush1.msra.mxu0 0.0
        %1207 = vmatprep.subr.mxu0 0.0
        %1208 = vmatpush1.msra.mxu0 0.0
        %1209 = vmatprep.subr.mxu0 0.0
        %1210 = vmatpush1.msra.mxu0 0.0
        %1211 = vmatprep.subr.mxu0 0.0
        %1212 = vmatpush1.msra.mxu0 0.0
        %1213 = vmatprep.subr.mxu0 0.0
        %1214 = vmatpush1.msra.mxu0 0.0
        %1215 = vmatprep.subr.mxu0 0.0
        %1216 = vmatpush1.msra.mxu0 0.0
        %1217 = vmatprep.subr.mxu0 0.0
        %1218 = vmatpush1.msra.mxu0 0.0
        %1219 = vmatprep.subr.mxu0 0.0
        %1220 = vmatpush1.msra.mxu0 0.0
        %1221 = vmatprep.subr.mxu0 0.0
        %1222 = vmatpush1.msra.mxu0 0.0
        %1223 = vmatprep.subr.mxu0 0.0
        %1224 = vmatpush1.msra.mxu0 0.0
        %1225 = vmatprep.subr.mxu0 0.0
        %1226 = vmatpush1.msra.mxu0 0.0
        %1227 = vmatprep.subr.mxu0 0.0
        %1228 = vmatpush1.msra.mxu0 0.0
        %1229 = vmatprep.subr.mxu0 0.0
        %1230 = vmatpush1.msra.mxu0 0.0
        %1231 = vmatprep.subr.mxu0 0.0
        %1232 = vmatpush1.msra.mxu0 0.0
        %1233 = vmatprep.subr.mxu0 0.0
        %1234 = vmatpush1.msra.mxu0 0.0
        %1235 = vmatprep.subr.mxu0 0.0
        %1236 = vmatpush1.msra.mxu0 0.0
        %1237 = vmatprep.subr.mxu0 0.0
        %1238 = vmatpush1.msra.mxu0 0.0
        %1239 = vmatprep.subr.mxu0 0.0
        %1240 = vmatpush1.msra.mxu0 0.0
        %1241 = vmatprep.subr.mxu0 0.0
        %1242 = vmatpush1.msra.mxu0 0.0
        %1243 = vmatprep.subr.mxu0 0.0
        %1244 = vmatpush1.msra.mxu0 0.0
        %1245 = vmatprep.subr.mxu0 0.0
        %1246 = vmatpush1.msra.mxu0 0.0
        %1247 = vmatprep.subr.mxu0 0.0
        %1248 = vmatpush1.msra.mxu0 0.0
        %1249 = vmatprep.subr.mxu0 0.0
        %1250 = vmatpush1.msra.mxu0 0.0
        %1251 = vmatprep.mubr.f32.mxu0 0.0
        %1252 = vmatmul.mubr.f32.gmra.mrb[0].mxu0 %v1183
        %v1253 = vpop.f32.mrb[0].mxu0
        %v1254 = vadd.f32 0.0, %v1253
        %v1255 = vpop.f32.mrb[0].mxu0
        %1256 = vdwg.mxu0
        %1257 = vst.msk [vmem:[#allocation2 + $0x2] sm:$0x3] %vm1089, %v1254
        %v1258 = vrot.slane %v764, 4
        %v1259 = vrot.slane %v841, 4
        %v1260 = vsel %vm693, %v1258, 0
        %v1262 = vsel %vm693, %v1259, 0
        %1264 = vmatprep.subr.mxu0 0.0
        %1265 = vmatpush1.xpose.msra.mxu0 %v1262
        %1266 = vmatprep.subr.mxu0 0.0
        %1267 = vmatpush1.xpose.msra.mxu0 0.0
        %1268 = vmatprep.subr.mxu0 0.0
        %1269 = vmatpush1.xpose.msra.mxu0 0.0
        %1270 = vmatprep.subr.mxu0 0.0
        %1271 = vmatpush1.xpose.msra.mxu0 0.0
        %1272 = vmatprep.subr.mxu0 0.0
        %1273 = vmatpush1.xpose.msra.mxu0 0.0
        %1274 = vmatprep.subr.mxu0 0.0
        %1275 = vmatpush1.xpose.msra.mxu0 0.0
        %1276 = vmatprep.subr.mxu0 0.0
        %1277 = vmatpush1.xpose.msra.mxu0 0.0
        %1278 = vmatprep.subr.mxu0 0.0
        %1279 = vmatpush1.xpose.msra.mxu0 0.0
        %1280 = vmatprep.subr.mxu0 0.0
        %1281 = vmatpush1.xpose.msra.mxu0 0.0
        %1282 = vmatprep.subr.mxu0 0.0
        %1283 = vmatpush1.xpose.msra.mxu0 0.0
        %1284 = vmatprep.subr.mxu0 0.0
        %1285 = vmatpush1.xpose.msra.mxu0 0.0
        %1286 = vmatprep.subr.mxu0 0.0
        %1287 = vmatpush1.xpose.msra.mxu0 0.0
        %1288 = vmatprep.subr.mxu0 0.0
        %1289 = vmatpush1.xpose.msra.mxu0 0.0
        %1290 = vmatprep.subr.mxu0 0.0
        %1291 = vmatpush1.xpose.msra.mxu0 0.0
        %1292 = vmatprep.subr.mxu0 0.0
        %1293 = vmatpush1.xpose.msra.mxu0 0.0
        %1294 = vmatprep.subr.mxu0 0.0
        %1295 = vmatpush1.xpose.msra.mxu0 0.0
        %1296 = vmatprep.subr.mxu0 0.0
        %1297 = vmatpush1.xpose.msra.mxu0 0.0
        %1298 = vmatprep.subr.mxu0 0.0
        %1299 = vmatpush1.xpose.msra.mxu0 0.0
        %1300 = vmatprep.subr.mxu0 0.0
        %1301 = vmatpush1.xpose.msra.mxu0 0.0
        %1302 = vmatprep.subr.mxu0 0.0
        %1303 = vmatpush1.xpose.msra.mxu0 0.0
        %1304 = vmatprep.subr.mxu0 0.0
        %1305 = vmatpush1.xpose.msra.mxu0 0.0
        %1306 = vmatprep.subr.mxu0 0.0
        %1307 = vmatpush1.xpose.msra.mxu0 0.0
        %1308 = vmatprep.subr.mxu0 0.0
        %1309 = vmatpush1.xpose.msra.mxu0 0.0
        %1310 = vmatprep.subr.mxu0 0.0
        %1311 = vmatpush1.xpose.msra.mxu0 0.0
        %1312 = vmatprep.subr.mxu0 0.0
        %1313 = vmatpush1.xpose.msra.mxu0 0.0
        %1314 = vmatprep.subr.mxu0 0.0
        %1315 = vmatpush1.xpose.msra.mxu0 0.0
        %1316 = vmatprep.subr.mxu0 0.0
        %1317 = vmatpush1.xpose.msra.mxu0 0.0
        %1318 = vmatprep.subr.mxu0 0.0
        %1319 = vmatpush1.xpose.msra.mxu0 0.0
        %1320 = vmatprep.subr.mxu0 0.0
        %1321 = vmatpush1.xpose.msra.mxu0 0.0
        %1322 = vmatprep.subr.mxu0 0.0
        %1323 = vmatpush1.xpose.msra.mxu0 0.0
        %1324 = vmatprep.subr.mxu0 0.0
        %1325 = vmatpush1.xpose.msra.mxu0 0.0
        %1326 = vmatprep.subr.mxu0 0.0
        %1327 = vmatpush1.xpose.msra.mxu0 0.0
        %1328 = vmatprep.mubr.f32.mxu0 0.0
        %1329 = vmatmul.mubr.f32.gmra.mrb[0].mxu0 %v1260
        %v1330 = vpop.f32.mrb[0].mxu0
        %v1331 = vadd.f32 0.0, %v1330
        %v1332 = vpop.f32.mrb[0].mxu0
        %1333 = vdwg.mxu0
        %v1334 = vmul.f32 %v1331, 0.35355338
        %v1335 = vsel %vm998, %v1334, -inf
        %1336 = vmax.xlane.f32.xlu0 %v1335
        %v1337 = vpop.xlane.xlu0 %1336
        %v1338 = vsub.f32 %v1334, %v1337
        %v1339 = vmul.f32 %v1338, 1.442695
        %v1340 = vpow.pop %v1339
        %v1341 = vsel %vm998, %v1340, 0.0
        %1342 = vadd.xlane.f32.xlu0 %v1341
        %v1343 = vpop.xlane.xlu0 %1342
        %v1344 = vrcp.pop %v1343
        %v1345 = vmul.f32 %v1340, %v1344
        %s1346 = scalar_lea.vmem %s684, 4
        %1347 = vst.msk [vmem:[%s1346] sm:$0x3] %vm998, %v1345
        %v1348 = vrot.slane %v918, 4
        %v1350 = vsel %vm1011, %v1345, 0
        %v1352 = vsel %vm1015, %v1348, 0
        %1354 = vmatprep.subr.mxu0 0.0
        %1355 = vmatpush1.msra.mxu0 %v1352
        %1356 = vmatprep.subr.mxu0 0.0
        %1357 = vmatpush1.msra.mxu0 0.0
        %1358 = vmatprep.subr.mxu0 0.0
        %1359 = vmatpush1.msra.mxu0 0.0
        %1360 = vmatprep.subr.mxu0 0.0
        %1361 = vmatpush1.msra.mxu0 0.0
        %1362 = vmatprep.subr.mxu0 0.0
        %1363 = vmatpush1.msra.mxu0 0.0
        %1364 = vmatprep.subr.mxu0 0.0
        %1365 = vmatpush1.msra.mxu0 0.0
        %1366 = vmatprep.subr.mxu0 0.0
        %1367 = vmatpush1.msra.mxu0 0.0
        %1368 = vmatprep.subr.mxu0 0.0
        %1369 = vmatpush1.msra.mxu0 0.0
        %1370 = vmatprep.subr.mxu0 0.0
        %1371 = vmatpush1.msra.mxu0 0.0
        %1372 = vmatprep.subr.mxu0 0.0
        %1373 = vmatpush1.msra.mxu0 0.0
        %1374 = vmatprep.subr.mxu0 0.0
        %1375 = vmatpush1.msra.mxu0 0.0
        %1376 = vmatprep.subr.mxu0 0.0
        %1377 = vmatpush1.msra.mxu0 0.0
        %1378 = vmatprep.subr.mxu0 0.0
        %1379 = vmatpush1.msra.mxu0 0.0
        %1380 = vmatprep.subr.mxu0 0.0
        %1381 = vmatpush1.msra.mxu0 0.0
        %1382 = vmatprep.subr.mxu0 0.0
        %1383 = vmatpush1.msra.mxu0 0.0
        %1384 = vmatprep.subr.mxu0 0.0
        %1385 = vmatpush1.msra.mxu0 0.0
        %1386 = vmatprep.subr.mxu0 0.0
        %1387 = vmatpush1.msra.mxu0 0.0
        %1388 = vmatprep.subr.mxu0 0.0
        %1389 = vmatpush1.msra.mxu0 0.0
        %1390 = vmatprep.subr.mxu0 0.0
        %1391 = vmatpush1.msra.mxu0 0.0
        %1392 = vmatprep.subr.mxu0 0.0
        %1393 = vmatpush1.msra.mxu0 0.0
        %1394 = vmatprep.subr.mxu0 0.0
        %1395 = vmatpush1.msra.mxu0 0.0
        %1396 = vmatprep.subr.mxu0 0.0
        %1397 = vmatpush1.msra.mxu0 0.0
        %1398 = vmatprep.subr.mxu0 0.0
        %1399 = vmatpush1.msra.mxu0 0.0
        %1400 = vmatprep.subr.mxu0 0.0
        %1401 = vmatpush1.msra.mxu0 0.0
        %1402 = vmatprep.subr.mxu0 0.0
        %1403 = vmatpush1.msra.mxu0 0.0
        %1404 = vmatprep.subr.mxu0 0.0
        %1405 = vmatpush1.msra.mxu0 0.0
        %1406 = vmatprep.subr.mxu0 0.0
        %1407 = vmatpush1.msra.mxu0 0.0
        %1408 = vmatprep.subr.mxu0 0.0
        %1409 = vmatpush1.msra.mxu0 0.0
        %1410 = vmatprep.subr.mxu0 0.0
        %1411 = vmatpush1.msra.mxu0 0.0
        %1412 = vmatprep.subr.mxu0 0.0
        %1413 = vmatpush1.msra.mxu0 0.0
        %1414 = vmatprep.subr.mxu0 0.0
        %1415 = vmatpush1.msra.mxu0 0.0
        %1416 = vmatprep.subr.mxu0 0.0
        %1417 = vmatpush1.msra.mxu0 0.0
        %1418 = vmatprep.mubr.f32.mxu0 0.0
        %1419 = vmatmul.mubr.f32.gmra.mrb[0].mxu0 %v1350
        %v1420 = vpop.f32.mrb[0].mxu0
        %v1421 = vadd.f32 0.0, %v1420
        %v1422 = vpop.f32.mrb[0].mxu0
        %1423 = vdwg.mxu0
        %1424 = vst.msk [vmem:[#allocation2 + $0x4] sm:$0x3] %vm1089, %v1421
        %v1425 = vrot.slane %v764, 6
        %v1426 = vrot.slane %v841, 6
        %v1427 = vsel %vm693, %v1425, 0
        %v1429 = vsel %vm693, %v1426, 0
        %1431 = vmatprep.subr.mxu0 0.0
        %1432 = vmatpush1.xpose.msra.mxu0 %v1429
        %1433 = vmatprep.subr.mxu0 0.0
        %1434 = vmatpush1.xpose.msra.mxu0 0.0
        %1435 = vmatprep.subr.mxu0 0.0
        %1436 = vmatpush1.xpose.msra.mxu0 0.0
        %1437 = vmatprep.subr.mxu0 0.0
        %1438 = vmatpush1.xpose.msra.mxu0 0.0
        %1439 = vmatprep.subr.mxu0 0.0
        %1440 = vmatpush1.xpose.msra.mxu0 0.0
        %1441 = vmatprep.subr.mxu0 0.0
        %1442 = vmatpush1.xpose.msra.mxu0 0.0
        %1443 = vmatprep.subr.mxu0 0.0
        %1444 = vmatpush1.xpose.msra.mxu0 0.0
        %1445 = vmatprep.subr.mxu0 0.0
        %1446 = vmatpush1.xpose.msra.mxu0 0.0
        %1447 = vmatprep.subr.mxu0 0.0
        %1448 = vmatpush1.xpose.msra.mxu0 0.0
        %1449 = vmatprep.subr.mxu0 0.0
        %1450 = vmatpush1.xpose.msra.mxu0 0.0
        %1451 = vmatprep.subr.mxu0 0.0
        %1452 = vmatpush1.xpose.msra.mxu0 0.0
        %1453 = vmatprep.subr.mxu0 0.0
        %1454 = vmatpush1.xpose.msra.mxu0 0.0
        %1455 = vmatprep.subr.mxu0 0.0
        %1456 = vmatpush1.xpose.msra.mxu0 0.0
        %1457 = vmatprep.subr.mxu0 0.0
        %1458 = vmatpush1.xpose.msra.mxu0 0.0
        %1459 = vmatprep.subr.mxu0 0.0
        %1460 = vmatpush1.xpose.msra.mxu0 0.0
        %1461 = vmatprep.subr.mxu0 0.0
        %1462 = vmatpush1.xpose.msra.mxu0 0.0
        %1463 = vmatprep.subr.mxu0 0.0
        %1464 = vmatpush1.xpose.msra.mxu0 0.0
        %1465 = vmatprep.subr.mxu0 0.0
        %1466 = vmatpush1.xpose.msra.mxu0 0.0
        %1467 = vmatprep.subr.mxu0 0.0
        %1468 = vmatpush1.xpose.msra.mxu0 0.0
        %1469 = vmatprep.subr.mxu0 0.0
        %1470 = vmatpush1.xpose.msra.mxu0 0.0
        %1471 = vmatprep.subr.mxu0 0.0
        %1472 = vmatpush1.xpose.msra.mxu0 0.0
        %1473 = vmatprep.subr.mxu0 0.0
        %1474 = vmatpush1.xpose.msra.mxu0 0.0
        %1475 = vmatprep.subr.mxu0 0.0
        %1476 = vmatpush1.xpose.msra.mxu0 0.0
        %1477 = vmatprep.subr.mxu0 0.0
        %1478 = vmatpush1.xpose.msra.mxu0 0.0
        %1479 = vmatprep.subr.mxu0 0.0
        %1480 = vmatpush1.xpose.msra.mxu0 0.0
        %1481 = vmatprep.subr.mxu0 0.0
        %1482 = vmatpush1.xpose.msra.mxu0 0.0
        %1483 = vmatprep.subr.mxu0 0.0
        %1484 = vmatpush1.xpose.msra.mxu0 0.0
        %1485 = vmatprep.subr.mxu0 0.0
        %1486 = vmatpush1.xpose.msra.mxu0 0.0
        %1487 = vmatprep.subr.mxu0 0.0
        %1488 = vmatpush1.xpose.msra.mxu0 0.0
        %1489 = vmatprep.subr.mxu0 0.0
        %1490 = vmatpush1.xpose.msra.mxu0 0.0
        %1491 = vmatprep.subr.mxu0 0.0
        %1492 = vmatpush1.xpose.msra.mxu0 0.0
        %1493 = vmatprep.subr.mxu0 0.0
        %1494 = vmatpush1.xpose.msra.mxu0 0.0
        %1495 = vmatprep.mubr.f32.mxu0 0.0
        %1496 = vmatmul.mubr.f32.gmra.mrb[0].mxu0 %v1427
        %v1497 = vpop.f32.mrb[0].mxu0
        %v1498 = vadd.f32 0.0, %v1497
        %v1499 = vpop.f32.mrb[0].mxu0
        %1500 = vdwg.mxu0
        %v1501 = vmul.f32 %v1498, 0.35355338
        %v1502 = vsel %vm998, %v1501, -inf
        %1503 = vmax.xlane.f32.xlu0 %v1502
        %v1504 = vpop.xlane.xlu0 %1503
        %v1505 = vsub.f32 %v1501, %v1504
        %v1506 = vmul.f32 %v1505, 1.442695
        %v1507 = vpow.pop %v1506
        %v1508 = vsel %vm998, %v1507, 0.0
        %1509 = vadd.xlane.f32.xlu0 %v1508
        %v1510 = vpop.xlane.xlu0 %1509
        %v1511 = vrcp.pop %v1510
        %v1512 = vmul.f32 %v1507, %v1511
        %s1513 = scalar_lea.vmem %s684, 6
        %1514 = vst.msk [vmem:[%s1513] sm:$0x3] %vm998, %v1512
        %v1515 = vrot.slane %v918, 6
        %v1517 = vsel %vm1011, %v1512, 0
        %v1519 = vsel %vm1015, %v1515, 0
        %1521 = vmatprep.subr.mxu0 0.0
        %1522 = vmatpush1.msra.mxu0 %v1519
        %1523 = vmatprep.subr.mxu0 0.0
        %1524 = vmatpush1.msra.mxu0 0.0
        %1525 = vmatprep.subr.mxu0 0.0
        %1526 = vmatpush1.msra.mxu0 0.0
        %1527 = vmatprep.subr.mxu0 0.0
        %1528 = vmatpush1.msra.mxu0 0.0
        %1529 = vmatprep.subr.mxu0 0.0
        %1530 = vmatpush1.msra.mxu0 0.0
        %1531 = vmatprep.subr.mxu0 0.0
        %1532 = vmatpush1.msra.mxu0 0.0
        %1533 = vmatprep.subr.mxu0 0.0
        %1534 = vmatpush1.msra.mxu0 0.0
        %1535 = vmatprep.subr.mxu0 0.0
        %1536 = vmatpush1.msra.mxu0 0.0
        %1537 = vmatprep.subr.mxu0 0.0
        %1538 = vmatpush1.msra.mxu0 0.0
        %1539 = vmatprep.subr.mxu0 0.0
        %1540 = vmatpush1.msra.mxu0 0.0
        %1541 = vmatprep.subr.mxu0 0.0
        %1542 = vmatpush1.msra.mxu0 0.0
        %1543 = vmatprep.subr.mxu0 0.0
        %1544 = vmatpush1.msra.mxu0 0.0
        %1545 = vmatprep.subr.mxu0 0.0
        %1546 = vmatpush1.msra.mxu0 0.0
        %1547 = vmatprep.subr.mxu0 0.0
        %1548 = vmatpush1.msra.mxu0 0.0
        %1549 = vmatprep.subr.mxu0 0.0
        %1550 = vmatpush1.msra.mxu0 0.0
        %1551 = vmatprep.subr.mxu0 0.0
        %1552 = vmatpush1.msra.mxu0 0.0
        %1553 = vmatprep.subr.mxu0 0.0
        %1554 = vmatpush1.msra.mxu0 0.0
        %1555 = vmatprep.subr.mxu0 0.0
        %1556 = vmatpush1.msra.mxu0 0.0
        %1557 = vmatprep.subr.mxu0 0.0
        %1558 = vmatpush1.msra.mxu0 0.0
        %1559 = vmatprep.subr.mxu0 0.0
        %1560 = vmatpush1.msra.mxu0 0.0
        %1561 = vmatprep.subr.mxu0 0.0
        %1562 = vmatpush1.msra.mxu0 0.0
        %1563 = vmatprep.subr.mxu0 0.0
        %1564 = vmatpush1.msra.mxu0 0.0
        %1565 = vmatprep.subr.mxu0 0.0
        %1566 = vmatpush1.msra.mxu0 0.0
        %1567 = vmatprep.subr.mxu0 0.0
        %1568 = vmatpush1.msra.mxu0 0.0
        %1569 = vmatprep.subr.mxu0 0.0
        %1570 = vmatpush1.msra.mxu0 0.0
        %1571 = vmatprep.subr.mxu0 0.0
        %1572 = vmatpush1.msra.mxu0 0.0
        %1573 = vmatprep.subr.mxu0 0.0
        %1574 = vmatpush1.msra.mxu0 0.0
        %1575 = vmatprep.subr.mxu0 0.0
        %1576 = vmatpush1.msra.mxu0 0.0
        %1577 = vmatprep.subr.mxu0 0.0
        %1578 = vmatpush1.msra.mxu0 0.0
        %1579 = vmatprep.subr.mxu0 0.0
        %1580 = vmatpush1.msra.mxu0 0.0
        %1581 = vmatprep.subr.mxu0 0.0
        %1582 = vmatpush1.msra.mxu0 0.0
        %1583 = vmatprep.subr.mxu0 0.0
        %1584 = vmatpush1.msra.mxu0 0.0
        %1585 = vmatprep.mubr.f32.mxu0 0.0
        %1586 = vmatmul.mubr.f32.gmra.mrb[0].mxu0 %v1517
        %v1587 = vpop.f32.mrb[0].mxu0
        %v1588 = vadd.f32 0.0, %v1587
        %v1589 = vpop.f32.mrb[0].mxu0
        %1590 = vdwg.mxu0
        %1591 = vst.msk [vmem:[#allocation2 + $0x6] sm:$0x3] %vm1089, %v1588
        %v1592 = vld [vmem:[#allocation2] sm:$0xff]
        %v1593 = vld [vmem:[#allocation8] sm:$0xff]
        %v1594 = vld [vmem:[#allocation8 + $0x8] sm:$0xff]
        %v1595 = vld [vmem:[#allocation8 + $0x10] sm:$0xff]
        %v1596 = vld [vmem:[#allocation8 + $0x18] sm:$0xff]
        %v1597 = vld [vmem:[%s7] sm:$0x1]
        %v1599 = vlaneseq
        %v1600 = vshrl.u32 %v1599, 7
        %v1601 = vsub.s32 0, %v1600
        %v1602 = vrot.slane %v1597, %v1601
        %v1605 = vsel %vm693, %v1592, 0
        %1607 = vmatprep.subr.mxu0 0.0
        %1608 = vmatpush1.msra.mxu0 %v1593
        %1609 = vmatprep.subr.mxu0 0.0
        %1610 = vmatpush1.msra.mxu0 %v1594
        %1611 = vmatprep.subr.mxu0 0.0
        %1612 = vmatpush1.msra.mxu0 %v1595
        %1613 = vmatprep.subr.mxu0 0.0
        %1614 = vmatpush1.msra.mxu0 %v1596
        %1615 = vmatprep.subr.mxu0 0.0
        %1616 = vmatpush1.msra.mxu0 0.0
        %1617 = vmatprep.subr.mxu0 0.0
        %1618 = vmatpush1.msra.mxu0 0.0
        %1619 = vmatprep.subr.mxu0 0.0
        %1620 = vmatpush1.msra.mxu0 0.0
        %1621 = vmatprep.subr.mxu0 0.0
        %1622 = vmatpush1.msra.mxu0 0.0
        %1623 = vmatprep.subr.mxu0 0.0
        %1624 = vmatpush1.msra.mxu0 0.0
        %1625 = vmatprep.subr.mxu0 0.0
        %1626 = vmatpush1.msra.mxu0 0.0
        %1627 = vmatprep.subr.mxu0 0.0
        %1628 = vmatpush1.msra.mxu0 0.0
        %1629 = vmatprep.subr.mxu0 0.0
        %1630 = vmatpush1.msra.mxu0 0.0
        %1631 = vmatprep.subr.mxu0 0.0
        %1632 = vmatpush1.msra.mxu0 0.0
        %1633 = vmatprep.subr.mxu0 0.0
        %1634 = vmatpush1.msra.mxu0 0.0
        %1635 = vmatprep.subr.mxu0 0.0
        %1636 = vmatpush1.msra.mxu0 0.0
        %1637 = vmatprep.subr.mxu0 0.0
        %1638 = vmatpush1.msra.mxu0 0.0
        %1639 = vmatprep.subr.mxu0 0.0
        %1640 = vmatpush1.msra.mxu0 0.0
        %1641 = vmatprep.subr.mxu0 0.0
        %1642 = vmatpush1.msra.mxu0 0.0
        %1643 = vmatprep.subr.mxu0 0.0
        %1644 = vmatpush1.msra.mxu0 0.0
        %1645 = vmatprep.subr.mxu0 0.0
        %1646 = vmatpush1.msra.mxu0 0.0
        %1647 = vmatprep.subr.mxu0 0.0
        %1648 = vmatpush1.msra.mxu0 0.0
        %1649 = vmatprep.subr.mxu0 0.0
        %1650 = vmatpush1.msra.mxu0 0.0
        %1651 = vmatprep.subr.mxu0 0.0
        %1652 = vmatpush1.msra.mxu0 0.0
        %1653 = vmatprep.subr.mxu0 0.0
        %1654 = vmatpush1.msra.mxu0 0.0
        %1655 = vmatprep.subr.mxu0 0.0
        %1656 = vmatpush1.msra.mxu0 0.0
        %1657 = vmatprep.subr.mxu0 0.0
        %1658 = vmatpush1.msra.mxu0 0.0
        %1659 = vmatprep.subr.mxu0 0.0
        %1660 = vmatpush1.msra.mxu0 0.0
        %1661 = vmatprep.subr.mxu0 0.0
        %1662 = vmatpush1.msra.mxu0 0.0
        %1663 = vmatprep.subr.mxu0 0.0
        %1664 = vmatpush1.msra.mxu0 0.0
        %1665 = vmatprep.subr.mxu0 0.0
        %1666 = vmatpush1.msra.mxu0 0.0
        %1667 = vmatprep.subr.mxu0 0.0
        %1668 = vmatpush1.msra.mxu0 0.0
        %1669 = vmatprep.subr.mxu0 0.0
        %1670 = vmatpush1.msra.mxu0 0.0
        %1671 = vmatprep.mubr.f32.mxu0 0.0
        %1672 = vmatmul.mubr.f32.gmra.mrb[0].mxu0 %v1605
        %v1673 = vpop.f32.mrb[0].mxu0
        %v1674 = vadd.f32 %v1602, %v1673
        %v1675 = vpop.f32.mrb[0].mxu0
        %1676 = vdwg.mxu0
        %v1677 = vadd.f32 %v686, %v1674
        %v1678 = vld [vmem:[%s8] sm:$0x1]
        %v1679 = vld [vmem:[%s9] sm:$0x1]
        %v1680 = vsel %vm693, %v1677, 0.0
        %1681 = vadd.xlane.f32.xlu0 %v1680
        %v1682 = vpop.xlane.xlu0 %1681
        %v1683 = vrcp.pop 32.0
        %v1684 = vmul.f32 %v1682, %v1683
        %v1685 = vsub.f32 %v1677, %v1684
        %v1686 = vmul.f32 %v1685, %v1685
        %v1687 = vsel %vm693, %v1686, 0.0
        %1688 = vadd.xlane.f32.xlu0 %v1687
        %v1689 = vpop.xlane.xlu0 %1688
        %v1690 = vmul.f32 %v1689, %v1683
        %v1691 = vadd.f32 %v1690, 1e-05
        %v1692 = vrsqrt.pop %v1691
        %v1693 = vmul.f32 %v1685, %v1692
        %v1695 = vlaneseq
        %v1696 = vshrl.u32 %v1695, 7
        %v1697 = vsub.s32 0, %v1696
        %v1698 = vrot.slane %v1678, %v1697
        %v1700 = vmul.f32 %v1693, %v1698
        %v1702 = vlaneseq
        %v1703 = vshrl.u32 %v1702, 7
        %v1704 = vsub.s32 0, %v1703
        %v1705 = vrot.slane %v1679, %v1704
        %v1707 = vadd.f32 %v1700, %v1705
        %v1708 = vld [vmem:[#allocation9] sm:$0xff]
        %v1709 = vld [vmem:[#allocation9 + $0x8] sm:$0xff]
        %v1710 = vld [vmem:[#allocation9 + $0x10] sm:$0xff]
        %v1711 = vld [vmem:[#allocation9 + $0x18] sm:$0xff]
        %v1712 = vld [vmem:[%s11] sm:$0x1]
        %v1714 = vlaneseq
        %v1715 = vshrl.u32 %v1714, 7
        %v1716 = vsub.s32 0, %v1715
        %v1717 = vrot.slane %v1712, %v1716
        %v1720 = vsel %vm693, %v1707, 0
        %1722 = vmatprep.subr.mxu0 0.0
        %1723 = vmatpush1.msra.mxu0 %v1708
        %1724 = vmatprep.subr.mxu0 0.0
        %1725 = vmatpush1.msra.mxu0 %v1709
        %1726 = vmatprep.subr.mxu0 0.0
        %1727 = vmatpush1.msra.mxu0 %v1710
        %1728 = vmatprep.subr.mxu0 0.0
        %1729 = vmatpush1.msra.mxu0 %v1711
        %1730 = vmatprep.subr.mxu0 0.0
        %1731 = vmatpush1.msra.mxu0 0.0
        %1732 = vmatprep.subr.mxu0 0.0
        %1733 = vmatpush1.msra.mxu0 0.0
        %1734 = vmatprep.subr.mxu0 0.0
        %1735 = vmatpush1.msra.mxu0 0.0
        %1736 = vmatprep.subr.mxu0 0.0
        %1737 = vmatpush1.msra.mxu0 0.0
        %1738 = vmatprep.subr.mxu0 0.0
        %1739 = vmatpush1.msra.mxu0 0.0
        %1740 = vmatprep.subr.mxu0 0.0
        %1741 = vmatpush1.msra.mxu0 0.0
        %1742 = vmatprep.subr.mxu0 0.0
        %1743 = vmatpush1.msra.mxu0 0.0
        %1744 = vmatprep.subr.mxu0 0.0
        %1745 = vmatpush1.msra.mxu0 0.0
        %1746 = vmatprep.subr.mxu0 0.0
        %1747 = vmatpush1.msra.mxu0 0.0
        %1748 = vmatprep.subr.mxu0 0.0
        %1749 = vmatpush1.msra.mxu0 0.0
        %1750 = vmatprep.subr.mxu0 0.0
        %1751 = vmatpush1.msra.mxu0 0.0
        %1752 = vmatprep.subr.mxu0 0.0
        %1753 = vmatpush1.msra.mxu0 0.0
        %1754 = vmatprep.subr.mxu0 0.0
        %1755 = vmatpush1.msra.mxu0 0.0
        %1756 = vmatprep.subr.mxu0 0.0
        %1757 = vmatpush1.msra.mxu0 0.0
        %1758 = vmatprep.subr.mxu0 0.0
        %1759 = vmatpush1.msra.mxu0 0.0
        %1760 = vmatprep.subr.mxu0 0.0
        %1761 = vmatpush1.msra.mxu0 0.0
        %1762 = vmatprep.subr.mxu0 0.0
        %1763 = vmatpush1.msra.mxu0 0.0
        %1764 = vmatprep.subr.mxu0 0.0
        %1765 = vmatpush1.msra.mxu0 0.0
        %1766 = vmatprep.subr.mxu0 0.0
        %1767 = vmatpush1.msra.mxu0 0.0
        %1768 = vmatprep.subr.mxu0 0.0
        %1769 = vmatpush1.msra.mxu0 0.0
        %1770 = vmatprep.subr.mxu0 0.0
        %1771 = vmatpush1.msra.mxu0 0.0
        %1772 = vmatprep.subr.mxu0 0.0
        %1773 = vmatpush1.msra.mxu0 0.0
        %1774 = vmatprep.subr.mxu0 0.0
        %1775 = vmatpush1.msra.mxu0 0.0
        %1776 = vmatprep.subr.mxu0 0.0
        %1777 = vmatpush1.msra.mxu0 0.0
        %1778 = vmatprep.subr.mxu0 0.0
        %1779 = vmatpush1.msra.mxu0 0.0
        %1780 = vmatprep.subr.mxu0 0.0
        %1781 = vmatpush1.msra.mxu0 0.0
        %1782 = vmatprep.subr.mxu0 0.0
        %1783 = vmatpush1.msra.mxu0 0.0
        %1784 = vmatprep.subr.mxu0 0.0
        %1785 = vmatpush1.msra.mxu0 0.0
        %1786 = vmatprep.mubr.f32.mxu0 0.0
        %1787 = vmatmul.mubr.f32.gmra.mrb[0].mxu0 %v1720
        %v1788 = vpop.f32.mrb[0].mxu0
        %v1789 = vadd.f32 %v1717, %v1788
        %v1790 = vpop.f32.mrb[0].mxu0
        %1791 = vdwg.mxu0
        %v1792 = vmax.f32 %v1789, 0.0
        %v1793 = vld [vmem:[%s12] sm:$0xff]
        %v1794 = vld [vmem:[%s12 + $0x8] sm:$0xff]
        %v1795 = vld [vmem:[%s12 + $0x10] sm:$0xff]
        %v1796 = vld [vmem:[%s12 + $0x18] sm:$0xff]
        %v1797 = vld [vmem:[%s12 + $0x20] sm:$0xff]
        %v1798 = vld [vmem:[%s12 + $0x28] sm:$0xff]
        %v1799 = vld [vmem:[%s12 + $0x30] sm:$0xff]
        %v1800 = vld [vmem:[%s12 + $0x38] sm:$0xff]
        %v1801 = vld [vmem:[%s13] sm:$0x1]
        %v1803 = vlaneseq
        %v1804 = vshrl.u32 %v1803, 7
        %v1805 = vsub.s32 0, %v1804
        %v1806 = vrot.slane %v1801, %v1805
        %vm1808 = vcmask 523264
        %v1810 = vsel %vm1808, %v1792, 0
        %1812 = vmatprep.subr.mxu0 0.0
        %1813 = vmatpush1.msra.mxu0 %v1793
        %1814 = vmatprep.subr.mxu0 0.0
        %1815 = vmatpush1.msra.mxu0 %v1794
        %1816 = vmatprep.subr.mxu0 0.0
        %1817 = vmatpush1.msra.mxu0 %v1795
        %1818 = vmatprep.subr.mxu0 0.0
        %1819 = vmatpush1.msra.mxu0 %v1796
        %1820 = vmatprep.subr.mxu0 0.0
        %1821 = vmatpush1.msra.mxu0 %v1797
        %1822 = vmatprep.subr.mxu0 0.0
        %1823 = vmatpush1.msra.mxu0 %v1798
        %1824 = vmatprep.subr.mxu0 0.0
        %1825 = vmatpush1.msra.mxu0 %v1799
        %1826 = vmatprep.subr.mxu0 0.0
        %1827 = vmatpush1.msra.mxu0 %v1800
        %1828 = vmatprep.subr.mxu0 0.0
        %1829 = vmatpush1.msra.mxu0 0.0
        %1830 = vmatprep.subr.mxu0 0.0
        %1831 = vmatpush1.msra.mxu0 0.0
        %1832 = vmatprep.subr.mxu0 0.0
        %1833 = vmatpush1.msra.mxu0 0.0
        %1834 = vmatprep.subr.mxu0 0.0
        %1835 = vmatpush1.msra.mxu0 0.0
        %1836 = vmatprep.subr.mxu0 0.0
        %1837 = vmatpush1.msra.mxu0 0.0
        %1838 = vmatprep.subr.mxu0 0.0
        %1839 = vmatpush1.msra.mxu0 0.0
        %1840 = vmatprep.subr.mxu0 0.0
        %1841 = vmatpush1.msra.mxu0 0.0
        %1842 = vmatprep.subr.mxu0 0.0
        %1843 = vmatpush1.msra.mxu0 0.0
        %1844 = vmatprep.subr.mxu0 0.0
        %1845 = vmatpush1.msra.mxu0 0.0
        %1846 = vmatprep.subr.mxu0 0.0
        %1847 = vmatpush1.msra.mxu0 0.0
        %1848 = vmatprep.subr.mxu0 0.0
        %1849 = vmatpush1.msra.mxu0 0.0
        %1850 = vmatprep.subr.mxu0 0.0
        %1851 = vmatpush1.msra.mxu0 0.0
        %1852 = vmatprep.subr.mxu0 0.0
        %1853 = vmatpush1.msra.mxu0 0.0
        %1854 = vmatprep.subr.mxu0 0.0
        %1855 = vmatpush1.msra.mxu0 0.0
        %1856 = vmatprep.subr.mxu0 0.0
        %1857 = vmatpush1.msra.mxu0 0.0
        %1858 = vmatprep.subr.mxu0 0.0
        %1859 = vmatpush1.msra.mxu0 0.0
        %1860 = vmatprep.subr.mxu0 0.0
        %1861 = vmatpush1.msra.mxu0 0.0
        %1862 = vmatprep.subr.mxu0 0.0
        %1863 = vmatpush1.msra.mxu0 0.0
        %1864 = vmatprep.subr.mxu0 0.0
        %1865 = vmatpush1.msra.mxu0 0.0
        %1866 = vmatprep.subr.mxu0 0.0
        %1867 = vmatpush1.msra.mxu0 0.0
        %1868 = vmatprep.subr.mxu0 0.0
        %1869 = vmatpush1.msra.mxu0 0.0
        %1870 = vmatprep.subr.mxu0 0.0
        %1871 = vmatpush1.msra.mxu0 0.0
        %1872 = vmatprep.subr.mxu0 0.0
        %1873 = vmatpush1.msra.mxu0 0.0
        %1874 = vmatprep.subr.mxu0 0.0
        %1875 = vmatpush1.msra.mxu0 0.0
        %1876 = vmatprep.mubr.f32.mxu0 0.0
        %1877 = vmatmul.mubr.f32.gmra.mrb[0].mxu0 %v1810
        %v1878 = vpop.f32.mrb[0].mxu0
        %v1879 = vadd.f32 %v1806, %v1878
        %v1880 = vpop.f32.mrb[0].mxu0
        %1881 = vdwg.mxu0
        %v1882 = vadd.f32 %v1707, %v1879
        %v1883 = vld [vmem:[#allocation11] sm:$0x1]
        %v1884 = vld [vmem:[#allocation12] sm:$0x1]
        %v1885 = vsel %vm693, %v1882, 0.0
        %1886 = vadd.xlane.f32.xlu0 %v1885
        %v1887 = vpop.xlane.xlu0 %1886
        %v1888 = vmul.f32 %v1887, %v1683
        %v1889 = vsub.f32 %v1882, %v1888
        %v1890 = vmul.f32 %v1889, %v1889
        %v1891 = vsel %vm693, %v1890, 0.0
        %1892 = vadd.xlane.f32.xlu0 %v1891
        %v1893 = vpop.xlane.xlu0 %1892
        %v1894 = vmul.f32 %v1893, %v1683
        %v1895 = vadd.f32 %v1894, 1e-05
        %v1896 = vrsqrt.pop %v1895
        %v1897 = vmul.f32 %v1889, %v1896
        %v1899 = vlaneseq
        %v1900 = vshrl.u32 %v1899, 7
        %v1901 = vsub.s32 0, %v1900
        %v1902 = vrot.slane %v1883, %v1901
        %v1904 = vmul.f32 %v1897, %v1902
        %v1906 = vlaneseq
        %v1907 = vshrl.u32 %v1906, 7
        %v1908 = vsub.s32 0, %v1907
        %v1909 = vrot.slane %v1884, %v1908
        %v1911 = vadd.f32 %v1904, %v1909
        %1912 = vst.msk [vmem:[%s668] sm:$0xff] %vm693, %v1911
        %s1913 = sand.u32 %s399, 1
        %s1914 = scalar_lea.sflag [#allocation5], %s1913
        %s1915 = sand.u32 %s399, 1
        %s1916 = smul.addr %s1915, 8
        %s1917 = scalar_lea.vmem [#allocation14], %s1916
        %s1918 = smul.u32 4, %s40
        %p1919 = scmp.lt.s32.totalorder %s1918, 7
        %s1920 = scalar_select %p1919, %s1918, 7
        %s1921 = smul.addr %s1920, 2
        %s1922 = scalar_lea.vmem %s17, %s1921
        // Predicated region
        $region109: #{encoder_layer.1} parent=83 // pred_check
          %p1923 = pneg %p409
        $region110: #{encoder_layer.1} parent=83 // pred_check_branch
          %1925 = sbr.rel (%p1923) target = $region112
        $region111: #{encoder_layer.1} parent=83 // pred_region
          %s1927 = ssub.s32 128, 128
          %1928 = vsyncadd %s1914, %s1927
          %s1929 = smul.addr %s40, 128
          %s1930 = scalar_lea.hbm %s16, %s1929
          %s1932 = sshll.u32 %s1917, 4
          %s1933 = int_to_ptr.vmem [resolvable:$true] %s1932
          %1935 = dma.vmem_to_hbm [thread:$0]  %s1933, 128, %s1930, %s1914
        $region112: #{encoder_layer.1} parent=83 // pred_fallthru
          _
        // Predicated region
        $region113: #{encoder_layer.1} parent=83 // pred_check
          %p1936 = pneg %p435
        $region114: #{encoder_layer.1} parent=83 // pred_check_branch
          %1938 = sbr.rel (%p1936) target = $region116
        $region115: #{encoder_layer.1} parent=83 // pred_region
          %s1939 = smul.u32 4, %s40
        $region116: #{encoder_layer.1} parent=83 // pred_fallthru
          _
      $region84: #{encoder_layer.1} parent=5 // pred_fallthru
        _
      %p1940 = scmp.le.s32.totalorder 2, %s35
      // Predicated region
      $region117: #{encoder_layer.1} parent=5 // pred_check
        %p1941 = pneg %p1940
      $region118: #{encoder_layer.1} parent=5 // pred_check_branch
        %1943 = sbr.rel (%p1941) target = $region120
      $region119: #{encoder_layer.1} parent=5 // pred_region
        %s1944 = ssub.s32 %s35, 2
        // Predicated region
        $region121: #{encoder_layer.1} parent=119 // pred_check
          %p1945 = pneg %p415
        $region122: #{encoder_layer.1} parent=119 // pred_check_branch
          %1947 = sbr.rel (%p1945) target = $region124
        $region123: #{encoder_layer.1} parent=119 // pred_region
          %s1948 = sand.u32 %s400, 1
          %s1949 = scalar_lea.sflag [#allocation5], %s1948
          %s1950 = sand.u32 %s400, 1
          %s1951 = smul.addr %s1950, 8
          %s1952 = scalar_lea.vmem [#allocation14], %s1951
          %1953 = dma.done %s1949, 128
        $region124: #{encoder_layer.1} parent=119 // pred_fallthru
          _
        // Predicated region
        $region125: #{encoder_layer.1} parent=119 // pred_check
          %p1954 = pneg %p441
        $region126: #{encoder_layer.1} parent=119 // pred_check_branch
          %1956 = sbr.rel (%p1954) target = $region128
        $region127: #{encoder_layer.1} parent=119 // pred_region
          %s1957 = smul.u32 4, %s41
          %p1958 = scmp.lt.s32.totalorder %s1957, 7
          %s1959 = scalar_select %p1958, %s1957, 7
          %s1960 = smul.addr %s1959, 2
          %s1961 = scalar_lea.vmem %s17, %s1960
        $region128: #{encoder_layer.1} parent=119 // pred_fallthru
          _
      $region120: #{encoder_layer.1} parent=5 // pred_fallthru
        _
    $region6: #{encoder_layer.1} parent=1 // loop_footer
      %s39 = sadd.s32 1, %s35
    $region7: #{encoder_layer.1} parent=1 // loop_footer_branch
      %34 = sbr.rel target = $region3
    $region8: #{encoder_layer.1} parent=1 // loop_exit
      _
    %1962 = vsyncpa [#allocation4], 1
    %s1963 = scalar_lea.sflag [#allocation4], 1
    %1964 = vsyncpa %s1963, 1
    %1965 = vsyncpa [#allocation7], 1
    %s1966 = scalar_lea.sflag [#allocation7], 1
    %1967 = vsyncpa %s1966, 1
    %1968 = vsyncpa [#allocation10], 1
    %1969 = vsyncpa [#allocation13], 1
    %1970 = vsyncpa [#allocation5], 1
    %s1971 = scalar_lea.sflag [#allocation5], 1
    %1972 = vsyncpa %s1971, 1

</llo_original>
